<compile_context>
chip_gen: v7x
topology: tpu7x:2x2x1
jax: 0.10.0
libtpu: 0.0.40
codegen_flags: <defaults>
</compile_context>

<pallas_src>
import math
import functools

import numpy as np
import jax
import jax.numpy as jnp
from jax.experimental import pallas as pl
from jax.experimental.pallas import tpu as pltpu

_EPS = 1e-6  # matches nn.LayerNorm(dim, eps=1e-06) in the PyTorch Block


# ---------------------------------------------------------------------------
# In-kernel helpers (VPU/EUP/MXU-friendly ops only).
# ---------------------------------------------------------------------------
def _erf(x):
    # Abramowitz & Stegun 7.1.26 polynomial approximation of erf
    # (|abs error| < 1.5e-7), using exp + approx-reciprocal (EUP) + mul/add.
    a1, a2, a3, a4, a5 = 0.254829592, -0.284496736, 1.421413741, -1.453152027, 1.061405429
    p = 0.3275911
    s = jnp.where(x >= 0.0, 1.0, -1.0)
    ax = jnp.abs(x)
    t = pl.reciprocal(1.0 + p * ax, approx=True)
    poly = ((((a5 * t + a4) * t + a3) * t + a2) * t + a1) * t
    return s * (1.0 - poly * jnp.exp(-ax * ax))


def _gelu_exact(x):
    # PyTorch nn.GELU() default = exact (erf-based) GELU.
    return 0.5 * x * (1.0 + _erf(x * (1.0 / math.sqrt(2.0))))


def _center_rsqrt(x):
    # LayerNorm with gamma/beta folded into the downstream weights wrapper-side:
    # only centering + rsqrt normalization remain in-kernel.
    mu = jnp.mean(x, axis=-1, keepdims=True)
    xc = x - mu
    var = jnp.mean(xc * xc, axis=-1, keepdims=True)
    return xc * jax.lax.rsqrt(var + _EPS)


# ---------------------------------------------------------------------------
# Pallas kernel: full Block forward for one batch element (one grid step).
# ---------------------------------------------------------------------------
def block_kernel(x_ref, wqkv_ref, bqkv_ref, wp_ref, bp_ref,
                 w1_ref, b1_ref, w2_ref, b2_ref, o_ref, *, n_heads):
    f32, bf16 = jnp.float32, jnp.bfloat16
    _, S, D = x_ref.shape
    H = n_heads
    hd = D // H

    x = x_ref[0]                                          # (S, D) f32

    # ---------------- attention branch: x + proj(softmax(q k^T) v) -----------
    h1 = _center_rsqrt(x)                                 # LN1 (gamma/beta folded)
    # Fused lane-dense QKV matmul: (S, D) @ (D, 3D); softmax scale pre-folded
    # into the q columns, LN1 gamma folded into rows, LN1 beta into bqkv.
    qkv = jnp.dot(h1.astype(bf16), wqkv_ref[...],
                  preferred_element_type=f32) + bqkv_ref[0]          # (S, 3D)

    q = qkv[:, 0 * D:1 * D].reshape(S, H, hd)
    k = qkv[:, 1 * D:2 * D].reshape(S, H, hd)
    v = qkv[:, 2 * D:3 * D].reshape(S, H, hd)

    # TODO(synk): at real sequence lengths replace the materialized (H,S,S)
    # scores with a KV-tiled online-softmax (flash) inner loop.
    scores = jnp.einsum('qhe,khe->hqk', q.astype(bf16), k.astype(bf16),
                        preferred_element_type=f32)                  # (H, S, S)
    scores = scores - jnp.max(scores, axis=-1, keepdims=True)
    e = jnp.exp(scores)
    p_attn = e * pl.reciprocal(jnp.sum(e, axis=-1, keepdims=True), approx=True)

    ctx = jnp.einsum('hqk,khe->qhe', p_attn.astype(bf16), v.astype(bf16),
                     preferred_element_type=f32)                     # (S, H, hd)
    ctx = ctx.reshape(S, D)                                          # heads along lanes

    # Head reduction folded into the MXU K dimension: single (S, D) @ (D, D).
    attn_out = jnp.dot(ctx.astype(bf16), wp_ref[...],
                       preferred_element_type=f32) + bp_ref[0]
    y1 = x + attn_out

    # ---------------- MLP branch: x + fc2(gelu(fc1(ln(x)))) -------------------
    h2 = _center_rsqrt(y1)                                # LN2 (gamma/beta folded)
    hid = jnp.dot(h2.astype(bf16), w1_ref[...],
                  preferred_element_type=f32) + b1_ref[0]            # (S, HID)
    hid = _gelu_exact(hid)
    mlp = jnp.dot(hid.astype(bf16), w2_ref[...],
                  preferred_element_type=f32) + b2_ref[0]            # (S, D)

    o_ref[0] = (y1 + mlp).astype(o_ref.dtype)


# ---------------------------------------------------------------------------
# Wrapper: one-time weight preparation (scale / LN-gamma folds, bf16 cast) +
# a batch-tiled pallas_call with weights VMEM-resident across grid steps.
# ---------------------------------------------------------------------------
def transformer_block(x, params, n_heads):
    B, S, D = x.shape
    hd = D // n_heads
    f32, bf16 = jnp.float32, jnp.bfloat16

    # Fold softmax scale into the q columns of Wqkv.
    scale = jnp.concatenate([jnp.full((D,), hd ** -0.5, f32), jnp.ones((2 * D,), f32)])
    wqkv_scaled = params["wqkv"].astype(f32) * scale[None, :]              # (D, 3D)
    # Fold LN1 gamma (row scale) and beta (bias) into the QKV projection.
    wqkv_f = (params["ln1_w"].reshape(D, 1) * wqkv_scaled).astype(bf16)    # (D, 3D)
    bqkv_f = (params["ln1_b"].astype(f32) @ wqkv_scaled).astype(f32)       # (1, 3D)

    wproj = params["wproj"].astype(bf16)                                   # (D, D)
    bproj = params["bproj"].astype(f32)                                    # (1, D)

    # Fold LN2 gamma/beta into fc1.
    w1_f = (params["ln2_w"].reshape(D, 1) * params["w1"].astype(f32)).astype(bf16)
    b1_f = (params["b1"].astype(f32)
            + params["ln2_b"].astype(f32) @ params["w1"].astype(f32)).astype(f32)
    w2 = params["w2"].astype(bf16)                                         # (HID, D)
    b2 = params["b2"].astype(f32)                                          # (1, D)

    weights = (wqkv_f, bqkv_f, wproj, bproj, w1_f, b1_f, w2, b2)

    def resident_spec(a):
        zeros = (0,) * a.ndim
        return pl.BlockSpec(a.shape, lambda b: zeros)   # constant block -> stays resident

    x_spec = pl.BlockSpec((1, S, D), lambda b: (b, 0, 0))
    out_spec = pl.BlockSpec((1, S, D), lambda b: (b, 0, 0))

    # Explicit VMEM budget: resident weights + a few double-buffered activation
    # tiles + working set for in-kernel intermediates, with a safe floor.
    resident_bytes = sum(int(np.prod(a.shape)) * a.dtype.itemsize for a in weights)
    tile_bytes = S * D * 4
    vmem_limit = int(min(100 << 20,
                         max(32 << 20, 2 * resident_bytes + 16 * tile_bytes + (4 << 20))))

    kernel = functools.partial(block_kernel, n_heads=n_heads)
    return pl.pallas_call(
        kernel,
        out_shape=jax.ShapeDtypeStruct((B, S, D), x.dtype),
        grid_spec=pltpu.PrefetchScalarGridSpec(
            num_scalar_prefetch=0,
            grid=(B,),                               # token tiles, one batch element each
            in_specs=[x_spec] + [resident_spec(a) for a in weights],
            out_specs=out_spec,
        ),
        compiler_params=pltpu.CompilerParams(
            dimension_semantics=("parallel",),       # v7x: both TensorCores split batches
            vmem_limit_bytes=vmem_limit,
        ),
    )(x, *weights)


# ---------------------------------------------------------------------------
# Pure-JAX f32 reference (mirrors the PyTorch module exactly) for verification.
# ---------------------------------------------------------------------------
def reference_block(x, p, n_heads):
    def ln(t, w, b):
        mu = t.mean(-1, keepdims=True)
        var = ((t - mu) ** 2).mean(-1, keepdims=True)
        return (t - mu) / jnp.sqrt(var + _EPS) * w + b

    B, S, D = x.shape
    hd = D // n_heads
    h = ln(x, p["ln1_w"], p["ln1_b"])
    qkv = h @ p["wqkv"]
    qkv = qkv.reshape(B, S, 3, n_heads, hd).transpose(2, 0, 3, 1, 4)
    q, k, v = qkv[0], qkv[1], qkv[2]
    attn = (q @ jnp.swapaxes(k, -2, -1)) * hd ** (-0.5)
    attn = jax.nn.softmax(attn, axis=-1)
    out = (attn @ v).transpose(0, 2, 1, 3).reshape(B, S, D)
    out = out @ p["wproj"] + p["bproj"]
    y1 = x + out
    h2 = ln(y1, p["ln2_w"], p["ln2_b"])
    m = jax.nn.gelu(h2 @ p["w1"] + p["b1"], approximate=False)
    m = m @ p["w2"] + p["b2"]
    return y1 + m


if __name__ == "__main__":
    # Small ViT-block config: dim=32, heads=4, mlp_ratio=4, qkv_bias=False, drop=0.
    B, S, D = 2, 8, 32
    N_HEADS = 4
    HIDDEN = int(D * 4.0)

    key = jax.random.PRNGKey(0)
    ks = jax.random.split(key, 12)
    f32 = jnp.float32
    params = {
        # non-trivial LN params so the wrapper-side gamma/beta folds are exercised
        "ln1_w": (1.0 + 0.1 * jax.random.normal(ks[8], (1, D))).astype(f32),
        "ln1_b": (0.05 * jax.random.normal(ks[9], (1, D))).astype(f32),
        "wqkv":  (0.02 * jax.random.normal(ks[0], (D, 3 * D))).astype(f32),
        "wproj": (0.02 * jax.random.normal(ks[1], (D, D))).astype(f32),
        "bproj": (0.01 * jax.random.normal(ks[2], (1, D))).astype(f32),
        "ln2_w": (1.0 + 0.1 * jax.random.normal(ks[10], (1, D))).astype(f32),
        "ln2_b": (0.05 * jax.random.normal(ks[11], (1, D))).astype(f32),
        "w1":    (0.02 * jax.random.normal(ks[3], (D, HIDDEN))).astype(f32),
        "b1":    (0.01 * jax.random.normal(ks[4], (1, HIDDEN))).astype(f32),
        "w2":    (0.02 * jax.random.normal(ks[5], (HIDDEN, D))).astype(f32),
        "b2":    (0.01 * jax.random.normal(ks[6], (1, D))).astype(f32),
    }
    x = jax.random.normal(ks[7], (B, S, D), dtype=f32)

    out = jax.block_until_ready(transformer_block(x, params, N_HEADS))
    ref = jax.block_until_ready(reference_block(x, params, N_HEADS))

    assert out.shape == (B, S, D) and out.dtype == jnp.float32
    # bf16 MXU operands + approx reciprocal: validate against f32 reference
    # with a tolerance that still catches any structural/math error.
    np.testing.assert_allclose(np.asarray(out), np.asarray(ref), rtol=1e-2, atol=1e-2)

    print("KERNEL_OK")
</pallas_src>

<mosaic_0001>
module attributes {stable_mosaic.version = 11 : i64} {
  func.func @block_kernel(%arg0: i32, %arg1: memref<1x8x32xf32, #tpu.memory_space<vmem>>, %arg2: memref<32x96xbf16, #tpu.memory_space<vmem>>, %arg3: memref<1x96xf32, #tpu.memory_space<vmem>>, %arg4: memref<32x32xbf16, #tpu.memory_space<vmem>>, %arg5: memref<1x32xf32, #tpu.memory_space<vmem>>, %arg6: memref<32x128xbf16, #tpu.memory_space<vmem>>, %arg7: memref<1x128xf32, #tpu.memory_space<vmem>>, %arg8: memref<128x32xbf16, #tpu.memory_space<vmem>>, %arg9: memref<1x32xf32, #tpu.memory_space<vmem>>, %arg10: memref<1x8x32xf32, #tpu.memory_space<vmem>>) attributes {dimension_semantics = [#tpu.dimension_semantics<parallel>], iteration_bounds = array<i64: 2>, scalar_prefetch = 0 : i64, scratch_operands = 0 : i64, tpu.core_type = #tpu.core_type<tc>, window_params = [{transform_indices = @transform_0, window_bounds = array<i64: 1, 8, 32>}, {pipeline_mode = #tpu.pipeline_mode<synchronous>, transform_indices = @transform_1, window_bounds = array<i64: 32, 96>}, {pipeline_mode = #tpu.pipeline_mode<synchronous>, transform_indices = @transform_2, window_bounds = array<i64: 1, 96>}, {pipeline_mode = #tpu.pipeline_mode<synchronous>, transform_indices = @transform_3, window_bounds = array<i64: 32, 32>}, {pipeline_mode = #tpu.pipeline_mode<synchronous>, transform_indices = @transform_4, window_bounds = array<i64: 1, 32>}, {pipeline_mode = #tpu.pipeline_mode<synchronous>, transform_indices = @transform_5, window_bounds = array<i64: 32, 128>}, {pipeline_mode = #tpu.pipeline_mode<synchronous>, transform_indices = @transform_6, window_bounds = array<i64: 1, 128>}, {pipeline_mode = #tpu.pipeline_mode<synchronous>, transform_indices = @transform_7, window_bounds = array<i64: 128, 32>}, {pipeline_mode = #tpu.pipeline_mode<synchronous>, transform_indices = @transform_8, window_bounds = array<i64: 1, 32>}, {transform_indices = @transform_9, window_bounds = array<i64: 1, 8, 32>}]} {
    %c0 = arith.constant 0 : index
    %c0_0 = arith.constant 0 : index
    %c0_1 = arith.constant 0 : index
    %0 = vector.load %arg1[%c0, %c0_0, %c0_1] : memref<1x8x32xf32, #tpu.memory_space<vmem>>, vector<1x8x32xf32>
    %1 = vector.shape_cast %0 : vector<1x8x32xf32> to vector<8x32xf32>
    %cst = arith.constant dense<0.000000e+00> : vector<8xf32>
    %2 = vector.multi_reduction <add>, %1, %cst [1] : vector<8x32xf32> to vector<8xf32>
    %3 = vector.shape_cast %2 : vector<8xf32> to vector<8x1xf32>
    %cst_2 = arith.constant 3.200000e+01 : f32
    %4 = vector.broadcast %cst_2 : f32 to vector<8x1xf32>
    %5 = arith.divf %3, %4 : vector<8x1xf32>
    %6 = vector.broadcast %5 : vector<8x1xf32> to vector<8x32xf32>
    %7 = arith.subf %1, %6 : vector<8x32xf32>
    %8 = arith.mulf %7, %7 : vector<8x32xf32>
    %cst_3 = arith.constant dense<0.000000e+00> : vector<8xf32>
    %9 = vector.multi_reduction <add>, %8, %cst_3 [1] : vector<8x32xf32> to vector<8xf32>
    %10 = vector.shape_cast %9 : vector<8xf32> to vector<8x1xf32>
    %cst_4 = arith.constant 3.200000e+01 : f32
    %11 = vector.broadcast %cst_4 : f32 to vector<8x1xf32>
    %12 = arith.divf %10, %11 : vector<8x1xf32>
    %cst_5 = arith.constant 9.99999997E-7 : f32
    %13 = vector.broadcast %cst_5 : f32 to vector<8x1xf32>
    %14 = arith.addf %12, %13 : vector<8x1xf32>
    %15 = math.rsqrt %14 : vector<8x1xf32>
    %16 = vector.broadcast %15 : vector<8x1xf32> to vector<8x32xf32>
    %17 = arith.mulf %7, %16 : vector<8x32xf32>
    %18 = arith.truncf %17 : vector<8x32xf32> to vector<8x32xbf16>
    %c0_6 = arith.constant 0 : index
    %c0_7 = arith.constant 0 : index
    %19 = vector.load %arg2[%c0_6, %c0_7] : memref<32x96xbf16, #tpu.memory_space<vmem>>, vector<32x96xbf16>
    %cst_8 = arith.constant dense<0.000000e+00> : vector<8x96xf32>
    %20 = tpu.matmul %18, %19, %cst_8 {dimension_numbers = #tpu.dot_dimension_numbers<[1], [0], [0], [1], [0, 0, 1, 1], [], []>} : vector<8x32xbf16>, vector<32x96xbf16>, vector<8x96xf32> -> vector<8x96xf32>
    %c0_9 = arith.constant 0 : index
    %c0_10 = arith.constant 0 : index
    %21 = vector.load %arg3[%c0_9, %c0_10] : memref<1x96xf32, #tpu.memory_space<vmem>>, vector<1x96xf32>
    %22 = vector.shape_cast %21 : vector<1x96xf32> to vector<96xf32>
    %23 = vector.shape_cast %22 : vector<96xf32> to vector<1x96xf32>
    %24 = vector.broadcast %23 : vector<1x96xf32> to vector<8x96xf32>
    %25 = arith.addf %20, %24 : vector<8x96xf32>
    %26 = vector.extract_strided_slice %25 {offsets = [0, 0], sizes = [8, 32], strides = [1, 1]} : vector<8x96xf32> to vector<8x32xf32>
    %27 = vector.shape_cast %26 : vector<8x32xf32> to vector<8x4x8xf32>
    %28 = vector.extract_strided_slice %25 {offsets = [0, 32], sizes = [8, 32], strides = [1, 1]} : vector<8x96xf32> to vector<8x32xf32>
    %29 = vector.shape_cast %28 : vector<8x32xf32> to vector<8x4x8xf32>
    %30 = vector.extract_strided_slice %25 {offsets = [0, 64], sizes = [8, 32], strides = [1, 1]} : vector<8x96xf32> to vector<8x32xf32>
    %31 = vector.shape_cast %30 : vector<8x32xf32> to vector<8x4x8xf32>
    %32 = arith.truncf %27 : vector<8x4x8xf32> to vector<8x4x8xbf16>
    %33 = arith.truncf %29 : vector<8x4x8xf32> to vector<8x4x8xbf16>
    "tpu.trace_start"() <{level = 10 : i32, message = "qhe,khe->hqk"}> : () -> ()
    %cst_11 = arith.constant dense<0.000000e+00> : vector<4x8x8xf32>
    %34 = tpu.matmul %32, %33, %cst_11 {dimension_numbers = #tpu.dot_dimension_numbers<[2], [2], [0], [0], [0, 1, 0, 0, 1, 0], [1], [1]>} : vector<8x4x8xbf16>, vector<8x4x8xbf16>, vector<4x8x8xf32> -> vector<4x8x8xf32>
    "tpu.trace_stop"() : () -> ()
    %cst_12 = arith.constant dense<0xFF800000> : vector<4x8xf32>
    %35 = vector.multi_reduction <maximumf>, %34, %cst_12 [2] : vector<4x8x8xf32> to vector<4x8xf32>
    %36 = vector.shape_cast %35 : vector<4x8xf32> to vector<4x8x1xf32>
    %37 = vector.broadcast %36 : vector<4x8x1xf32> to vector<4x8x8xf32>
    %38 = arith.subf %34, %37 : vector<4x8x8xf32>
    %39 = math.exp %38 : vector<4x8x8xf32>
    %cst_13 = arith.constant dense<0.000000e+00> : vector<4x8xf32>
    %40 = vector.multi_reduction <add>, %39, %cst_13 [2] : vector<4x8x8xf32> to vector<4x8xf32>
    %41 = vector.shape_cast %40 : vector<4x8xf32> to vector<4x8x1xf32>
    %42 = tpu.reciprocal %41 {approx = true} : vector<4x8x1xf32> -> vector<4x8x1xf32>
    %43 = vector.broadcast %42 : vector<4x8x1xf32> to vector<4x8x8xf32>
    %44 = arith.mulf %39, %43 : vector<4x8x8xf32>
    %45 = arith.truncf %44 : vector<4x8x8xf32> to vector<4x8x8xbf16>
    %46 = arith.truncf %31 : vector<8x4x8xf32> to vector<8x4x8xbf16>
    "tpu.trace_start"() <{level = 10 : i32, message = "hqk,khe->qhe"}> : () -> ()
    %cst_14 = arith.constant dense<0.000000e+00> : vector<4x8x8xf32>
    %47 = tpu.matmul %46, %45, %cst_14 {dimension_numbers = #tpu.dot_dimension_numbers<[0], [2], [2], [1], [0, 1, 0, 2, 1, 1], [1], [0]>} : vector<8x4x8xbf16>, vector<4x8x8xbf16>, vector<4x8x8xf32> -> vector<4x8x8xf32>
    %48 = tpu.transpose %47, [2, 0, 1] : vector<4x8x8xf32> -> vector<8x4x8xf32>
    "tpu.trace_stop"() : () -> ()
    %49 = vector.shape_cast %48 : vector<8x4x8xf32> to vector<8x32xf32>
    %50 = arith.truncf %49 : vector<8x32xf32> to vector<8x32xbf16>
    %c0_15 = arith.constant 0 : index
    %c0_16 = arith.constant 0 : index
    %51 = vector.load %arg4[%c0_15, %c0_16] : memref<32x32xbf16, #tpu.memory_space<vmem>>, vector<32x32xbf16>
    %cst_17 = arith.constant dense<0.000000e+00> : vector<8x32xf32>
    %52 = tpu.matmul %50, %51, %cst_17 {dimension_numbers = #tpu.dot_dimension_numbers<[1], [0], [0], [1], [0, 0, 1, 1], [], []>} : vector<8x32xbf16>, vector<32x32xbf16>, vector<8x32xf32> -> vector<8x32xf32>
    %c0_18 = arith.constant 0 : index
    %c0_19 = arith.constant 0 : index
    %53 = vector.load %arg5[%c0_18, %c0_19] : memref<1x32xf32, #tpu.memory_space<vmem>>, vector<1x32xf32>
    %54 = vector.shape_cast %53 : vector<1x32xf32> to vector<32xf32>
    %55 = vector.shape_cast %54 : vector<32xf32> to vector<1x32xf32>
    %56 = vector.broadcast %55 : vector<1x32xf32> to vector<8x32xf32>
    %57 = arith.addf %52, %56 : vector<8x32xf32>
    %58 = arith.addf %1, %57 : vector<8x32xf32>
    %cst_20 = arith.constant dense<0.000000e+00> : vector<8xf32>
    %59 = vector.multi_reduction <add>, %58, %cst_20 [1] : vector<8x32xf32> to vector<8xf32>
    %60 = vector.shape_cast %59 : vector<8xf32> to vector<8x1xf32>
    %cst_21 = arith.constant 3.200000e+01 : f32
    %61 = vector.broadcast %cst_21 : f32 to vector<8x1xf32>
    %62 = arith.divf %60, %61 : vector<8x1xf32>
    %63 = vector.broadcast %62 : vector<8x1xf32> to vector<8x32xf32>
    %64 = arith.subf %58, %63 : vector<8x32xf32>
    %65 = arith.mulf %64, %64 : vector<8x32xf32>
    %cst_22 = arith.constant dense<0.000000e+00> : vector<8xf32>
    %66 = vector.multi_reduction <add>, %65, %cst_22 [1] : vector<8x32xf32> to vector<8xf32>
    %67 = vector.shape_cast %66 : vector<8xf32> to vector<8x1xf32>
    %cst_23 = arith.constant 3.200000e+01 : f32
    %68 = vector.broadcast %cst_23 : f32 to vector<8x1xf32>
    %69 = arith.divf %67, %68 : vector<8x1xf32>
    %cst_24 = arith.constant 9.99999997E-7 : f32
    %70 = vector.broadcast %cst_24 : f32 to vector<8x1xf32>
    %71 = arith.addf %69, %70 : vector<8x1xf32>
    %72 = math.rsqrt %71 : vector<8x1xf32>
    %73 = vector.broadcast %72 : vector<8x1xf32> to vector<8x32xf32>
    %74 = arith.mulf %64, %73 : vector<8x32xf32>
    %75 = arith.truncf %74 : vector<8x32xf32> to vector<8x32xbf16>
    %c0_25 = arith.constant 0 : index
    %c0_26 = arith.constant 0 : index
    %76 = vector.load %arg6[%c0_25, %c0_26] : memref<32x128xbf16, #tpu.memory_space<vmem>>, vector<32x128xbf16>
    %cst_27 = arith.constant dense<0.000000e+00> : vector<8x128xf32>
    %77 = tpu.matmul %75, %76, %cst_27 {dimension_numbers = #tpu.dot_dimension_numbers<[1], [0], [0], [1], [0, 0, 1, 1], [], []>} : vector<8x32xbf16>, vector<32x128xbf16>, vector<8x128xf32> -> vector<8x128xf32>
    %c0_28 = arith.constant 0 : index
    %c0_29 = arith.constant 0 : index
    %78 = vector.load %arg7[%c0_28, %c0_29] : memref<1x128xf32, #tpu.memory_space<vmem>>, vector<1x128xf32>
    %79 = vector.shape_cast %78 : vector<1x128xf32> to vector<128xf32>
    %80 = vector.shape_cast %79 : vector<128xf32> to vector<1x128xf32>
    %81 = vector.broadcast %80 : vector<1x128xf32> to vector<8x128xf32>
    %82 = arith.addf %77, %81 : vector<8x128xf32>
    %cst_30 = arith.constant 5.000000e-01 : f32
    %83 = vector.broadcast %cst_30 : f32 to vector<8x128xf32>
    %84 = arith.mulf %83, %82 : vector<8x128xf32>
    %cst_31 = arith.constant 0.707106769 : f32
    %85 = vector.broadcast %cst_31 : f32 to vector<8x128xf32>
    %86 = arith.mulf %82, %85 : vector<8x128xf32>
    %cst_32 = arith.constant 0.000000e+00 : f32
    %87 = vector.broadcast %cst_32 : f32 to vector<8x128xf32>
    %88 = arith.cmpf oge, %86, %87 : vector<8x128xf32>
    %cst_33 = arith.constant 1.000000e+00 : f32
    %cst_34 = arith.constant -1.000000e+00 : f32
    %89 = vector.broadcast %cst_33 : f32 to vector<8x128xf32>
    %90 = vector.broadcast %cst_34 : f32 to vector<8x128xf32>
    %91 = arith.select %88, %89, %90 : vector<8x128xi1>, vector<8x128xf32>
    %92 = math.absf %86 : vector<8x128xf32>
    %cst_35 = arith.constant 0.327591091 : f32
    %93 = vector.broadcast %cst_35 : f32 to vector<8x128xf32>
    %94 = arith.mulf %93, %92 : vector<8x128xf32>
    %cst_36 = arith.constant 1.000000e+00 : f32
    %95 = vector.broadcast %cst_36 : f32 to vector<8x128xf32>
    %96 = arith.addf %95, %94 : vector<8x128xf32>
    %97 = tpu.reciprocal %96 {approx = true} : vector<8x128xf32> -> vector<8x128xf32>
    %cst_37 = arith.constant 1.06140542 : f32
    %98 = vector.broadcast %cst_37 : f32 to vector<8x128xf32>
    %99 = arith.mulf %98, %97 : vector<8x128xf32>
    %cst_38 = arith.constant -1.45315206 : f32
    %100 = vector.broadcast %cst_38 : f32 to vector<8x128xf32>
    %101 = arith.addf %99, %100 : vector<8x128xf32>
    %102 = arith.mulf %101, %97 : vector<8x128xf32>
    %cst_39 = arith.constant 1.42141378 : f32
    %103 = vector.broadcast %cst_39 : f32 to vector<8x128xf32>
    %104 = arith.addf %102, %103 : vector<8x128xf32>
    %105 = arith.mulf %104, %97 : vector<8x128xf32>
    %cst_40 = arith.constant -0.284496725 : f32
    %106 = vector.broadcast %cst_40 : f32 to vector<8x128xf32>
    %107 = arith.addf %105, %106 : vector<8x128xf32>
    %108 = arith.mulf %107, %97 : vector<8x128xf32>
    %cst_41 = arith.constant 0.254829586 : f32
    %109 = vector.broadcast %cst_41 : f32 to vector<8x128xf32>
    %110 = arith.addf %108, %109 : vector<8x128xf32>
    %111 = arith.mulf %110, %97 : vector<8x128xf32>
    %cst_42 = arith.constant 0.000000e+00 : f32
    %112 = vector.broadcast %cst_42 : f32 to vector<8x128xf32>
    %113 = arith.subf %112, %92 : vector<8x128xf32>
    %114 = arith.mulf %113, %92 : vector<8x128xf32>
    %115 = math.exp %114 : vector<8x128xf32>
    %116 = arith.mulf %111, %115 : vector<8x128xf32>
    %cst_43 = arith.constant 1.000000e+00 : f32
    %117 = vector.broadcast %cst_43 : f32 to vector<8x128xf32>
    %118 = arith.subf %117, %116 : vector<8x128xf32>
    %119 = arith.mulf %91, %118 : vector<8x128xf32>
    %cst_44 = arith.constant 1.000000e+00 : f32
    %120 = vector.broadcast %cst_44 : f32 to vector<8x128xf32>
    %121 = arith.addf %120, %119 : vector<8x128xf32>
    %122 = arith.mulf %84, %121 : vector<8x128xf32>
    %123 = arith.truncf %122 : vector<8x128xf32> to vector<8x128xbf16>
    %c0_45 = arith.constant 0 : index
    %c0_46 = arith.constant 0 : index
    %124 = vector.load %arg8[%c0_45, %c0_46] : memref<128x32xbf16, #tpu.memory_space<vmem>>, vector<128x32xbf16>
    %cst_47 = arith.constant dense<0.000000e+00> : vector<8x32xf32>
    %125 = tpu.matmul %123, %124, %cst_47 {dimension_numbers = #tpu.dot_dimension_numbers<[1], [0], [0], [1], [0, 0, 1, 1], [], []>} : vector<8x128xbf16>, vector<128x32xbf16>, vector<8x32xf32> -> vector<8x32xf32>
    %c0_48 = arith.constant 0 : index
    %c0_49 = arith.constant 0 : index
    %126 = vector.load %arg9[%c0_48, %c0_49] : memref<1x32xf32, #tpu.memory_space<vmem>>, vector<1x32xf32>
    %127 = vector.shape_cast %126 : vector<1x32xf32> to vector<32xf32>
    %128 = vector.shape_cast %127 : vector<32xf32> to vector<1x32xf32>
    %129 = vector.broadcast %128 : vector<1x32xf32> to vector<8x32xf32>
    %130 = arith.addf %125, %129 : vector<8x32xf32>
    %131 = arith.addf %58, %130 : vector<8x32xf32>
    %c0_50 = arith.constant 0 : index
    %c0_51 = arith.constant 0 : index
    %c0_52 = arith.constant 0 : index
    %132 = vector.load %arg10[%c0_50, %c0_51, %c0_52] : memref<1x8x32xf32, #tpu.memory_space<vmem>>, vector<1x8x32xf32>
    %133 = vector.shape_cast %132 : vector<1x8x32xf32> to vector<8x32xf32>
    %134 = vector.shape_cast %131 : vector<8x32xf32> to vector<1x8x32xf32>
    tpu.vector_store %arg10[%c0_50, %c0_51, %c0_52], %134 {strides = array<i32>} : memref<1x8x32xf32, #tpu.memory_space<vmem>>, vector<1x8x32xf32>,
    return
  }
  func.func @transform_0(%arg0: i32) -> (i32, i32, i32) {
    %c0_i32 = arith.constant 0 : i32
    %c0_i32_0 = arith.constant 0 : i32
    %c0_i32_1 = arith.constant 0 : i32
    return %arg0, %c0_i32, %c0_i32_0 : i32, i32, i32
  }
  func.func @transform_1(%arg0: i32) -> (i32, i32) {
    %c0_i32 = arith.constant 0 : i32
    %c0_i32_0 = arith.constant 0 : i32
    %c0_i32_1 = arith.constant 0 : i32
    return %c0_i32, %c0_i32_0 : i32, i32
  }
  func.func @transform_2(%arg0: i32) -> (i32, i32) {
    %c0_i32 = arith.constant 0 : i32
    %c0_i32_0 = arith.constant 0 : i32
    %c0_i32_1 = arith.constant 0 : i32
    return %c0_i32, %c0_i32_0 : i32, i32
  }
  func.func @transform_3(%arg0: i32) -> (i32, i32) {
    %c0_i32 = arith.constant 0 : i32
    %c0_i32_0 = arith.constant 0 : i32
    %c0_i32_1 = arith.constant 0 : i32
    return %c0_i32, %c0_i32_0 : i32, i32
  }
  func.func @transform_4(%arg0: i32) -> (i32, i32) {
    %c0_i32 = arith.constant 0 : i32
    %c0_i32_0 = arith.constant 0 : i32
    %c0_i32_1 = arith.constant 0 : i32
    return %c0_i32, %c0_i32_0 : i32, i32
  }
  func.func @transform_5(%arg0: i32) -> (i32, i32) {
    %c0_i32 = arith.constant 0 : i32
    %c0_i32_0 = arith.constant 0 : i32
    %c0_i32_1 = arith.constant 0 : i32
    return %c0_i32, %c0_i32_0 : i32, i32
  }
  func.func @transform_6(%arg0: i32) -> (i32, i32) {
    %c0_i32 = arith.constant 0 : i32
    %c0_i32_0 = arith.constant 0 : i32
    %c0_i32_1 = arith.constant 0 : i32
    return %c0_i32, %c0_i32_0 : i32, i32
  }
  func.func @transform_7(%arg0: i32) -> (i32, i32) {
    %c0_i32 = arith.constant 0 : i32
    %c0_i32_0 = arith.constant 0 : i32
    %c0_i32_1 = arith.constant 0 : i32
    return %c0_i32, %c0_i32_0 : i32, i32
  }
  func.func @transform_8(%arg0: i32) -> (i32, i32) {
    %c0_i32 = arith.constant 0 : i32
    %c0_i32_0 = arith.constant 0 : i32
    %c0_i32_1 = arith.constant 0 : i32
    return %c0_i32, %c0_i32_0 : i32, i32
  }
  func.func @transform_9(%arg0: i32) -> (i32, i32, i32) {
    %c0_i32 = arith.constant 0 : i32
    %c0_i32_0 = arith.constant 0 : i32
    %c0_i32_1 = arith.constant 0 : i32
    return %arg0, %c0_i32, %c0_i32_0 : i32, i32, i32
  }
}

</mosaic_0001>

<llo_original>
// kernel: tpu_custom_call.1
$region0: #{tpu_custom_call.1}
  #allocation0 [shape = 'u32[]', space=smem, size = 0x4, offset = 0x4, fixed_abs, tag = 'smem constant byte address 0x4 - core index']
  #allocation1 [shape = 'u32[144,128]{1,0:T(1,128)}', space=vmem, size = 0x12000, scoped, tag = 'internal scratch']
  %s0 = inlined_call_operand.vmem [shape: f32[2,8,32], index: 0, kind: input, shape index: {}]
  %s1 = inlined_call_operand.vmem [shape: bf16[32,96], index: 1, kind: input, shape index: {}]
  %s2 = inlined_call_operand.vmem [shape: f32[1,96], index: 2, kind: input, shape index: {}]
  %s3 = inlined_call_operand.vmem [shape: bf16[32,32], index: 3, kind: input, shape index: {}]
  %s4 = inlined_call_operand.vmem [shape: f32[1,32], index: 4, kind: input, shape index: {}]
  %s5 = inlined_call_operand.vmem [shape: bf16[32,128], index: 5, kind: input, shape index: {}]
  %s6 = inlined_call_operand.vmem [shape: f32[1,128], index: 6, kind: input, shape index: {}]
  %s7 = inlined_call_operand.vmem [shape: bf16[128,32], index: 7, kind: input, shape index: {}]
  %s8 = inlined_call_operand.vmem [shape: f32[1,32], index: 8, kind: input, shape index: {}]
  %s9 = inlined_call_operand.hbm [shape: f32[2,8,32], index: 9, kind: output, shape index: {}]
  %s10 = sld [smem:[#allocation0]]
  $region69: #{tpu_custom_call.1} parent=0
    _
  %s12 = ssub.s32 1, %s10
  %s13 = scalar_select 0, %s12, %s10
  $region1: #{tpu_custom_call.1} parent=0
    #allocation2 [shape = 'u8[8192]{0}', space=vmem, size = 0x2000, scoped, tag = 'output window, operand 0']
    #allocation3 [shape = 's32[2]{0}', space=sflag, size = 0x8, scoped, tag = 'scoped memory for tpu_custom_call.1']
    %14 = vsyncpa [#allocation3], 0
    %s15 = scalar_lea.sflag [#allocation3], 1
    %16 = vsyncpa %s15, 0
    loop: start=0, step=1, limit=4
    $region2: #{tpu_custom_call.1} parent=1 // loop_pre_header
      _
    $region3: #{tpu_custom_call.1} parent=1 // loop_header
      %s18 = sphi 0, %s22
      %p19 = scmp.ge.s32.totalorder %s18, 4
      %s28 = sphi 0, %s30
      %s31 = sphi 0, %s28
      %s32 = sphi 0, %s31
      %s48 = sphi 0, %s32
      %s52 = sphi 0, %s52
      %s54 = sphi 0, %s52
      %s55 = sphi 0, %s54
      %s69 = sphi 0, %s55
      %s73 = sphi 0, %s73
      %s75 = sphi 0, %s73
      %s76 = sphi 0, %s75
      %s90 = sphi 0, %s76
      %s94 = sphi 0, %s94
      %s96 = sphi 0, %s94
      %s97 = sphi 0, %s96
      %s111 = sphi 0, %s97
      %s115 = sphi 0, %s115
      %s117 = sphi 0, %s115
      %s118 = sphi 0, %s117
      %s132 = sphi 0, %s118
      %s136 = sphi 0, %s136
      %s138 = sphi 0, %s136
      %s139 = sphi 0, %s138
      %s153 = sphi 0, %s139
      %s157 = sphi 0, %s157
      %s159 = sphi 0, %s157
      %s160 = sphi 0, %s159
      %s174 = sphi 0, %s160
      %s178 = sphi 0, %s178
      %s180 = sphi 0, %s178
      %s181 = sphi 0, %s180
      %s195 = sphi 0, %s181
      %s199 = sphi 0, %s199
      %s201 = sphi 0, %s199
      %s202 = sphi 0, %s201
      %s216 = sphi 0, %s202
      %s222 = sphi 0, %s224
      %s225 = sphi 0, %s222
      %s226 = sphi 0, %s225
      %s242 = sphi 0, %s226
    $region4: #{tpu_custom_call.1} parent=1 // loop_header_branch
      %21 = sbr.rel (%p19) target = $region8
    $region5: #{tpu_custom_call.1} parent=1 // loop_body
      %s23 = ssub.s32 %s18, 1
      %s24 = ssub.s32 %s18, 2
      %s25 = sadd.s32 %s18, 1
      %s26 = ssub.s32 %s18, %s25
      %p27 = scmp.eq.s32.totalorder %s26, 0
      %s29 = sadd.s32 %s28, 1
      %s30 = scalar_select %p27, %s28, %s29
      %p33 = pneg %p27
      %p34 = scmp.eq.s32.totalorder %s18, 1
      %p35 = por %p33, %p34
      %p36 = scmp.ne.s32.totalorder %s28, %s31
      %p37 = scmp.eq.s32.totalorder %s18, 0
      %p38 = por %p36, %p37
      %p39 = scmp.ne.s32.totalorder %s28, %s31
      %p40 = scmp.eq.s32.totalorder %s23, 1
      %p41 = por %p39, %p40
      %p42 = scmp.ne.s32.totalorder %s31, %s32
      %p43 = scmp.eq.s32.totalorder %s23, 0
      %p44 = por %p42, %p43
      %p45 = scmp.ne.s32.totalorder %s31, %s32
      %p46 = scmp.eq.s32.totalorder %s24, 1
      %p47 = por %p45, %p46
      %p49 = scmp.ne.s32.totalorder %s32, %s48
      %p50 = scmp.eq.s32.totalorder %s24, 0
      %p51 = por %p49, %p50
      %s53 = sadd.s32 %s52, 1
      %p56 = scmp.eq.s32.totalorder %s18, 1
      %p57 = scmp.ne.s32.totalorder %s52, %s54
      %p58 = scmp.eq.s32.totalorder %s18, 0
      %p59 = por %p57, %p58
      %p60 = scmp.ne.s32.totalorder %s52, %s54
      %p61 = scmp.eq.s32.totalorder %s23, 1
      %p62 = por %p60, %p61
      %p63 = scmp.ne.s32.totalorder %s54, %s55
      %p64 = scmp.eq.s32.totalorder %s23, 0
      %p65 = por %p63, %p64
      %p66 = scmp.ne.s32.totalorder %s54, %s55
      %p67 = scmp.eq.s32.totalorder %s24, 1
      %p68 = por %p66, %p67
      %p70 = scmp.ne.s32.totalorder %s55, %s69
      %p71 = scmp.eq.s32.totalorder %s24, 0
      %p72 = por %p70, %p71
      %s74 = sadd.s32 %s73, 1
      %p77 = scmp.eq.s32.totalorder %s18, 1
      %p78 = scmp.ne.s32.totalorder %s73, %s75
      %p79 = scmp.eq.s32.totalorder %s18, 0
      %p80 = por %p78, %p79
      %p81 = scmp.ne.s32.totalorder %s73, %s75
      %p82 = scmp.eq.s32.totalorder %s23, 1
      %p83 = por %p81, %p82
      %p84 = scmp.ne.s32.totalorder %s75, %s76
      %p85 = scmp.eq.s32.totalorder %s23, 0
      %p86 = por %p84, %p85
      %p87 = scmp.ne.s32.totalorder %s75, %s76
      %p88 = scmp.eq.s32.totalorder %s24, 1
      %p89 = por %p87, %p88
      %p91 = scmp.ne.s32.totalorder %s76, %s90
      %p92 = scmp.eq.s32.totalorder %s24, 0
      %p93 = por %p91, %p92
      %s95 = sadd.s32 %s94, 1
      %p98 = scmp.eq.s32.totalorder %s18, 1
      %p99 = scmp.ne.s32.totalorder %s94, %s96
      %p100 = scmp.eq.s32.totalorder %s18, 0
      %p101 = por %p99, %p100
      %p102 = scmp.ne.s32.totalorder %s94, %s96
      %p103 = scmp.eq.s32.totalorder %s23, 1
      %p104 = por %p102, %p103
      %p105 = scmp.ne.s32.totalorder %s96, %s97
      %p106 = scmp.eq.s32.totalorder %s23, 0
      %p107 = por %p105, %p106
      %p108 = scmp.ne.s32.totalorder %s96, %s97
      %p109 = scmp.eq.s32.totalorder %s24, 1
      %p110 = por %p108, %p109
      %p112 = scmp.ne.s32.totalorder %s97, %s111
      %p113 = scmp.eq.s32.totalorder %s24, 0
      %p114 = por %p112, %p113
      %s116 = sadd.s32 %s115, 1
      %p119 = scmp.eq.s32.totalorder %s18, 1
      %p120 = scmp.ne.s32.totalorder %s115, %s117
      %p121 = scmp.eq.s32.totalorder %s18, 0
      %p122 = por %p120, %p121
      %p123 = scmp.ne.s32.totalorder %s115, %s117
      %p124 = scmp.eq.s32.totalorder %s23, 1
      %p125 = por %p123, %p124
      %p126 = scmp.ne.s32.totalorder %s117, %s118
      %p127 = scmp.eq.s32.totalorder %s23, 0
      %p128 = por %p126, %p127
      %p129 = scmp.ne.s32.totalorder %s117, %s118
      %p130 = scmp.eq.s32.totalorder %s24, 1
      %p131 = por %p129, %p130
      %p133 = scmp.ne.s32.totalorder %s118, %s132
      %p134 = scmp.eq.s32.totalorder %s24, 0
      %p135 = por %p133, %p134
      %s137 = sadd.s32 %s136, 1
      %p140 = scmp.eq.s32.totalorder %s18, 1
      %p141 = scmp.ne.s32.totalorder %s136, %s138
      %p142 = scmp.eq.s32.totalorder %s18, 0
      %p143 = por %p141, %p142
      %p144 = scmp.ne.s32.totalorder %s136, %s138
      %p145 = scmp.eq.s32.totalorder %s23, 1
      %p146 = por %p144, %p145
      %p147 = scmp.ne.s32.totalorder %s138, %s139
      %p148 = scmp.eq.s32.totalorder %s23, 0
      %p149 = por %p147, %p148
      %p150 = scmp.ne.s32.totalorder %s138, %s139
      %p151 = scmp.eq.s32.totalorder %s24, 1
      %p152 = por %p150, %p151
      %p154 = scmp.ne.s32.totalorder %s139, %s153
      %p155 = scmp.eq.s32.totalorder %s24, 0
      %p156 = por %p154, %p155
      %s158 = sadd.s32 %s157, 1
      %p161 = scmp.eq.s32.totalorder %s18, 1
      %p162 = scmp.ne.s32.totalorder %s157, %s159
      %p163 = scmp.eq.s32.totalorder %s18, 0
      %p164 = por %p162, %p163
      %p165 = scmp.ne.s32.totalorder %s157, %s159
      %p166 = scmp.eq.s32.totalorder %s23, 1
      %p167 = por %p165, %p166
      %p168 = scmp.ne.s32.totalorder %s159, %s160
      %p169 = scmp.eq.s32.totalorder %s23, 0
      %p170 = por %p168, %p169
      %p171 = scmp.ne.s32.totalorder %s159, %s160
      %p172 = scmp.eq.s32.totalorder %s24, 1
      %p173 = por %p171, %p172
      %p175 = scmp.ne.s32.totalorder %s160, %s174
      %p176 = scmp.eq.s32.totalorder %s24, 0
      %p177 = por %p175, %p176
      %s179 = sadd.s32 %s178, 1
      %p182 = scmp.eq.s32.totalorder %s18, 1
      %p183 = scmp.ne.s32.totalorder %s178, %s180
      %p184 = scmp.eq.s32.totalorder %s18, 0
      %p185 = por %p183, %p184
      %p186 = scmp.ne.s32.totalorder %s178, %s180
      %p187 = scmp.eq.s32.totalorder %s23, 1
      %p188 = por %p186, %p187
      %p189 = scmp.ne.s32.totalorder %s180, %s181
      %p190 = scmp.eq.s32.totalorder %s23, 0
      %p191 = por %p189, %p190
      %p192 = scmp.ne.s32.totalorder %s180, %s181
      %p193 = scmp.eq.s32.totalorder %s24, 1
      %p194 = por %p192, %p193
      %p196 = scmp.ne.s32.totalorder %s181, %s195
      %p197 = scmp.eq.s32.totalorder %s24, 0
      %p198 = por %p196, %p197
      %s200 = sadd.s32 %s199, 1
      %p203 = scmp.eq.s32.totalorder %s18, 1
      %p204 = scmp.ne.s32.totalorder %s199, %s201
      %p205 = scmp.eq.s32.totalorder %s18, 0
      %p206 = por %p204, %p205
      %p207 = scmp.ne.s32.totalorder %s199, %s201
      %p208 = scmp.eq.s32.totalorder %s23, 1
      %p209 = por %p207, %p208
      %p210 = scmp.ne.s32.totalorder %s201, %s202
      %p211 = scmp.eq.s32.totalorder %s23, 0
      %p212 = por %p210, %p211
      %p213 = scmp.ne.s32.totalorder %s201, %s202
      %p214 = scmp.eq.s32.totalorder %s24, 1
      %p215 = por %p213, %p214
      %p217 = scmp.ne.s32.totalorder %s202, %s216
      %p218 = scmp.eq.s32.totalorder %s24, 0
      %p219 = por %p217, %p218
      %s220 = ssub.s32 %s18, %s25
      %p221 = scmp.eq.s32.totalorder %s220, 0
      %s223 = sadd.s32 %s222, 1
      %s224 = scalar_select %p221, %s222, %s223
      %p227 = pneg %p221
      %p228 = scmp.eq.s32.totalorder %s18, 1
      %p229 = por %p227, %p228
      %p230 = scmp.ne.s32.totalorder %s222, %s225
      %p231 = scmp.eq.s32.totalorder %s18, 0
      %p232 = por %p230, %p231
      %p233 = scmp.ne.s32.totalorder %s222, %s225
      %p234 = scmp.eq.s32.totalorder %s23, 1
      %p235 = por %p233, %p234
      %p236 = scmp.ne.s32.totalorder %s225, %s226
      %p237 = scmp.eq.s32.totalorder %s23, 0
      %p238 = por %p236, %p237
      %p239 = scmp.ne.s32.totalorder %s225, %s226
      %p240 = scmp.eq.s32.totalorder %s24, 1
      %p241 = por %p239, %p240
      %p243 = scmp.ne.s32.totalorder %s226, %s242
      %p244 = scmp.eq.s32.totalorder %s24, 0
      %p245 = por %p243, %p244
      %p246 = scmp.le.s32.totalorder 1, %s18
      %p247 = scmp.lt.s32.totalorder %s18, 3
      %p248 = pnand %p246, %p247
      %p249 = pneg %p248
      // Predicated region
      $region9: #{tpu_custom_call.1} parent=5 // pred_check
        _
      $region10: #{tpu_custom_call.1} parent=5 // pred_check_branch
        %251 = sbr.rel (%p248) target = $region12
      $region11: #{tpu_custom_call.1} parent=5 // pred_region
        %s252 = ssub.s32 %s18, 1
        // Predicated region
        $region13: #{tpu_custom_call.1} parent=11 // pred_check
          %p253 = pneg %p65
        $region14: #{tpu_custom_call.1} parent=11 // pred_check_branch
          %255 = sbr.rel (%p253) target = $region16
        $region15: #{tpu_custom_call.1} parent=11 // pred_region
          _
        $region16: #{tpu_custom_call.1} parent=11 // pred_fallthru
          _
        // Predicated region
        $region17: #{tpu_custom_call.1} parent=11 // pred_check
          %p256 = pneg %p86
        $region18: #{tpu_custom_call.1} parent=11 // pred_check_branch
          %258 = sbr.rel (%p256) target = $region20
        $region19: #{tpu_custom_call.1} parent=11 // pred_region
          _
        $region20: #{tpu_custom_call.1} parent=11 // pred_fallthru
          _
        // Predicated region
        $region21: #{tpu_custom_call.1} parent=11 // pred_check
          %p259 = pneg %p107
        $region22: #{tpu_custom_call.1} parent=11 // pred_check_branch
          %261 = sbr.rel (%p259) target = $region24
        $region23: #{tpu_custom_call.1} parent=11 // pred_region
          _
        $region24: #{tpu_custom_call.1} parent=11 // pred_fallthru
          _
        // Predicated region
        $region25: #{tpu_custom_call.1} parent=11 // pred_check
          %p262 = pneg %p128
        $region26: #{tpu_custom_call.1} parent=11 // pred_check_branch
          %264 = sbr.rel (%p262) target = $region28
        $region27: #{tpu_custom_call.1} parent=11 // pred_region
          _
        $region28: #{tpu_custom_call.1} parent=11 // pred_fallthru
          _
        // Predicated region
        $region29: #{tpu_custom_call.1} parent=11 // pred_check
          %p265 = pneg %p149
        $region30: #{tpu_custom_call.1} parent=11 // pred_check_branch
          %267 = sbr.rel (%p265) target = $region32
        $region31: #{tpu_custom_call.1} parent=11 // pred_region
          _
        $region32: #{tpu_custom_call.1} parent=11 // pred_fallthru
          _
        // Predicated region
        $region33: #{tpu_custom_call.1} parent=11 // pred_check
          %p268 = pneg %p170
        $region34: #{tpu_custom_call.1} parent=11 // pred_check_branch
          %270 = sbr.rel (%p268) target = $region36
        $region35: #{tpu_custom_call.1} parent=11 // pred_region
          _
        $region36: #{tpu_custom_call.1} parent=11 // pred_fallthru
          _
        // Predicated region
        $region37: #{tpu_custom_call.1} parent=11 // pred_check
          %p271 = pneg %p191
        $region38: #{tpu_custom_call.1} parent=11 // pred_check_branch
          %273 = sbr.rel (%p271) target = $region40
        $region39: #{tpu_custom_call.1} parent=11 // pred_region
          _
        $region40: #{tpu_custom_call.1} parent=11 // pred_fallthru
          _
        // Predicated region
        $region41: #{tpu_custom_call.1} parent=11 // pred_check
          %p274 = pneg %p212
        $region42: #{tpu_custom_call.1} parent=11 // pred_check_branch
          %276 = sbr.rel (%p274) target = $region44
        $region43: #{tpu_custom_call.1} parent=11 // pred_region
          _
        $region44: #{tpu_custom_call.1} parent=11 // pred_fallthru
          _
      $region12: #{tpu_custom_call.1} parent=5 // pred_fallthru
        _
      %p277 = scmp.lt.s32.totalorder %s18, 2
      // Predicated region
      $region45: #{tpu_custom_call.1} parent=5 // pred_check
        %p278 = pneg %p277
      $region46: #{tpu_custom_call.1} parent=5 // pred_check_branch
        %280 = sbr.rel (%p278) target = $region48
      $region47: #{tpu_custom_call.1} parent=5 // pred_region
        // Predicated region
        $region49: #{tpu_custom_call.1} parent=47 // pred_check
          %p281 = pneg %p38
        $region50: #{tpu_custom_call.1} parent=47 // pred_check_branch
          %283 = sbr.rel (%p281) target = $region52
        $region51: #{tpu_custom_call.1} parent=47 // pred_region
          %p284 = scmp.lt.s32.totalorder %s18, 1
          %s285 = scalar_select %p284, %s18, 1
          %s286 = smul.addr %s285, 8
          %s287 = scalar_lea.vmem %s0, %s286
        $region52: #{tpu_custom_call.1} parent=47 // pred_fallthru
          _
      $region48: #{tpu_custom_call.1} parent=5 // pred_fallthru
        _
      %p288 = scmp.le.s32.totalorder 1, %s18
      %p289 = scmp.lt.s32.totalorder %s18, 3
      %p290 = pnand %p288, %p289
      %p291 = pneg %p290
      // Predicated region
      $region53: #{tpu_custom_call.1} parent=5 // pred_check
        _
      $region54: #{tpu_custom_call.1} parent=5 // pred_check_branch
        %293 = sbr.rel (%p290) target = $region56
      $region55: #{tpu_custom_call.1} parent=5 // pred_region
        %s294 = ssub.s32 %s18, 1
        %p295 = scmp.lt.s32.totalorder %s23, 1
        %s296 = scalar_select %p295, %s23, 1
        %s297 = smul.addr %s296, 8
        %s298 = scalar_lea.vmem %s0, %s297
        %p299 = pneg %p44
        %p300 = pneg %p41
        %p301 = pneg %p65
        %p302 = pneg %p62
        %p303 = pneg %p86
        %p304 = pneg %p83
        %p305 = pneg %p107
        %p306 = pneg %p104
        %p307 = pneg %p128
        %p308 = pneg %p125
        %p309 = pneg %p149
        %p310 = pneg %p146
        %p311 = pneg %p170
        %p312 = pneg %p167
        %p313 = pneg %p191
        %p314 = pneg %p188
        %p315 = pneg %p212
        %p316 = pneg %p209
        %p317 = pneg %p238
        %p318 = pneg %p235
        %s319 = sand.u32 %s225, 1
        %s320 = scalar_lea.sflag [#allocation3], %s319
        %s321 = sand.u32 %s225, 1
        %s322 = smul.addr %s321, 8
        %s323 = scalar_lea.vmem [#allocation2], %s322
        %p324 = scmp.lt.s32.totalorder %s23, 1
        %s325 = scalar_select %p324, %s23, 1
        %s326 = smul.addr %s325, 8
        %s327 = scalar_lea.vmem %s0, %s326
        %v329 = vld [vmem:[%s327] sm:$0xff]
        %vm330 = vcmask 261120
        %v331 = vsel %vm330, %v329, 0.0
        %332 = vadd.xlane.f32.xlu0 %v331
        %v333 = vpop.xlane.xlu0 %332
        %v334 = vrcp.pop 32.0
        %v335 = vmul.f32 %v333, %v334
        %v336 = vsub.f32 %v329, %v335
        %v337 = vmul.f32 %v336, %v336
        %v338 = vsel %vm330, %v337, 0.0
        %339 = vadd.xlane.f32.xlu0 %v338
        %v340 = vpop.xlane.xlu0 %339
        %v341 = vmul.f32 %v340, %v334
        %v342 = vadd.f32 %v341, 1e-06
        %v343 = vrsqrt.pop %v342
        %v344 = vmul.f32 %v336, %v343
        %v345 = vpack.c.bf16 %v344, %v344
        %v346 = vld [vmem:[%s1] sm:$0xf]
        %v347 = vld [vmem:[%s1 + $0x4] sm:$0xf]
        %v348 = vld [vmem:[%s1 + $0x8] sm:$0xf]
        %v349 = vld [vmem:[%s1 + $0xc] sm:$0xf]
        %v350 = vld [vmem:[%s2] sm:$0x1]
        %v352 = vlaneseq
        %v353 = vshrl.u32 %v352, 7
        %v354 = vsub.s32 0, %v353
        %v355 = vrot.slane %v350, %v354
        %v361 = vunpack.c.l.b16 %v346
        %v362 = vunpack.c.l.b16 %v347
        %v363 = vunpack.c.l.b16 %v348
        %v364 = vunpack.c.l.b16 %v349
        %v365 = vpack.c.b16 %v362, %v361
        %v366 = vpack.c.b16 %v364, %v363
        %v370 = vsel %vm330, %v345, 0
        %372 = vmatprep.subr.bf16.mxu0 0
        %373 = vmatpush1.bf16.msra.mxu0 %v365
        %374 = vmatprep.subr.bf16.mxu0 0
        %375 = vmatpush1.bf16.msra.mxu0 %v366
        %376 = vmatprep.subr.bf16.mxu0 0
        %377 = vmatpush1.bf16.msra.mxu0 0
        %378 = vmatprep.subr.bf16.mxu0 0
        %379 = vmatpush1.bf16.msra.mxu0 0
        %380 = vmatprep.subr.bf16.mxu0 0
        %381 = vmatpush1.bf16.msra.mxu0 0
        %382 = vmatprep.subr.bf16.mxu0 0
        %383 = vmatpush1.bf16.msra.mxu0 0
        %384 = vmatprep.subr.bf16.mxu0 0
        %385 = vmatpush1.bf16.msra.mxu0 0
        %386 = vmatprep.subr.bf16.mxu0 0
        %387 = vmatpush1.bf16.msra.mxu0 0
        %388 = vmatprep.subr.bf16.mxu0 0
        %389 = vmatpush1.bf16.msra.mxu0 0
        %390 = vmatprep.subr.bf16.mxu0 0
        %391 = vmatpush1.bf16.msra.mxu0 0
        %392 = vmatprep.subr.bf16.mxu0 0
        %393 = vmatpush1.bf16.msra.mxu0 0
        %394 = vmatprep.subr.bf16.mxu0 0
        %395 = vmatpush1.bf16.msra.mxu0 0
        %396 = vmatprep.subr.bf16.mxu0 0
        %397 = vmatpush1.bf16.msra.mxu0 0
        %398 = vmatprep.subr.bf16.mxu0 0
        %399 = vmatpush1.bf16.msra.mxu0 0
        %400 = vmatprep.subr.bf16.mxu0 0
        %401 = vmatpush1.bf16.msra.mxu0 0
        %402 = vmatprep.subr.bf16.mxu0 0
        %403 = vmatpush1.bf16.msra.mxu0 0
        %404 = vmatprep.mubr.bf16.mxu0 0
        %405 = vmatmul.mubr.bf16.gmra.mrb[0].mxu0 %v370
        %v406 = vpop.f32.mrb[0].mxu0
        %v407 = vadd.f32 %v355, %v406
        %v408 = vpop.f32.mrb[0].mxu0
        %v409 = vpop.f32.mrb[0].mxu0
        %v410 = vpop.f32.mrb[0].mxu0
        %411 = vdwg.mxu0
        %413 = vrot.lane.b32.xlu0 %v407, 120
        %v414 = vpop.permute.xlu0 %413
        %416 = vrot.lane.b32.xlu0 %v407, 112
        %v417 = vpop.permute.xlu0 %416
        %419 = vrot.lane.b32.xlu0 %v407, 104
        %v420 = vpop.permute.xlu0 %419
        %v422 = vcombine.low %v407, %v417
        %v423 = vcombine.high %v407, %v417
        %v425 = vunpack.c.l.s4 1983009808
        %v426 = vunpack.c.0.s8 %v425
        %v427 = vlaneseq
        %v428 = vshrl.u32 %v427, 7
        %v429 = vsub.s32 %v426, %v428
        %v430 = vrot.slane %v422, %v429
        %v432 = vunpack.c.l.s4 1983009808
        %v433 = vunpack.c.0.s8 %v432
        %v434 = vlaneseq
        %v435 = vshrl.u32 %v434, 7
        %v436 = vsub.s32 %v433, %v435
        %v437 = vrot.slane %v423, %v436
        %v438 = vcombine.low %v414, %v420
        %v439 = vcombine.high %v414, %v420
        %v441 = vunpack.c.l.s4 1983009808
        %v442 = vunpack.c.0.s8 %v441
        %v443 = vlaneseq
        %v444 = vshrl.u32 %v443, 7
        %v445 = vsub.s32 %v442, %v444
        %v446 = vrot.slane %v438, %v445
        %v448 = vunpack.c.l.s4 1983009808
        %v449 = vunpack.c.0.s8 %v448
        %v450 = vlaneseq
        %v451 = vshrl.u32 %v450, 7
        %v452 = vsub.s32 %v449, %v451
        %v453 = vrot.slane %v439, %v452
        %v454 = vcombine.low %v430, %v446
        %v455 = vcombine.high %v430, %v446
        %v457 = vunpack.c.l.s4 1934713408
        %v458 = vunpack.c.0.s8 %v457
        %v459 = vlaneseq
        %v460 = vshrl.u32 %v459, 7
        %v461 = vsub.s32 %v458, %v460
        %v462 = vrot.slane %v454, %v461
        %v464 = vunpack.c.l.s4 1934713408
        %v465 = vunpack.c.0.s8 %v464
        %v466 = vlaneseq
        %v467 = vshrl.u32 %v466, 7
        %v468 = vsub.s32 %v465, %v467
        %v469 = vrot.slane %v455, %v468
        %v470 = vcombine.low %v437, %v453
        %v471 = vcombine.high %v437, %v453
        %v473 = vunpack.c.l.s4 1934713408
        %v474 = vunpack.c.0.s8 %v473
        %v475 = vlaneseq
        %v476 = vshrl.u32 %v475, 7
        %v477 = vsub.s32 %v474, %v476
        %v478 = vrot.slane %v470, %v477
        %v480 = vunpack.c.l.s4 1934713408
        %v481 = vunpack.c.0.s8 %v480
        %v482 = vlaneseq
        %v483 = vshrl.u32 %v482, 7
        %v484 = vsub.s32 %v481, %v483
        %v485 = vrot.slane %v471, %v484
        %v486 = vcombine.high %v462, 0.0
        %v487 = vcombine.high %v469, 0.0
        %v488 = vcombine.high %v478, 0.0
        %v489 = vcombine.high %v485, 0.0
        %490 = vrot.lane.b32.xlu0 %v407, 96
        %v491 = vpop.permute.xlu0 %490
        %492 = vrot.lane.b32.xlu0 %v414, 96
        %v493 = vpop.permute.xlu0 %492
        %494 = vrot.lane.b32.xlu0 %v417, 96
        %v495 = vpop.permute.xlu0 %494
        %496 = vrot.lane.b32.xlu0 %v420, 96
        %v497 = vpop.permute.xlu0 %496
        %v502 = vcombine.low %v491, %v495
        %v503 = vcombine.high %v491, %v495
        %v505 = vunpack.c.l.s4 1983009808
        %v506 = vunpack.c.0.s8 %v505
        %v507 = vlaneseq
        %v508 = vshrl.u32 %v507, 7
        %v509 = vsub.s32 %v506, %v508
        %v510 = vrot.slane %v502, %v509
        %v512 = vunpack.c.l.s4 1983009808
        %v513 = vunpack.c.0.s8 %v512
        %v514 = vlaneseq
        %v515 = vshrl.u32 %v514, 7
        %v516 = vsub.s32 %v513, %v515
        %v517 = vrot.slane %v503, %v516
        %v518 = vcombine.low %v493, %v497
        %v519 = vcombine.high %v493, %v497
        %v521 = vunpack.c.l.s4 1983009808
        %v522 = vunpack.c.0.s8 %v521
        %v523 = vlaneseq
        %v524 = vshrl.u32 %v523, 7
        %v525 = vsub.s32 %v522, %v524
        %v526 = vrot.slane %v518, %v525
        %v528 = vunpack.c.l.s4 1983009808
        %v529 = vunpack.c.0.s8 %v528
        %v530 = vlaneseq
        %v531 = vshrl.u32 %v530, 7
        %v532 = vsub.s32 %v529, %v531
        %v533 = vrot.slane %v519, %v532
        %v534 = vcombine.low %v510, %v526
        %v535 = vcombine.high %v510, %v526
        %v537 = vunpack.c.l.s4 1934713408
        %v538 = vunpack.c.0.s8 %v537
        %v539 = vlaneseq
        %v540 = vshrl.u32 %v539, 7
        %v541 = vsub.s32 %v538, %v540
        %v542 = vrot.slane %v534, %v541
        %v544 = vunpack.c.l.s4 1934713408
        %v545 = vunpack.c.0.s8 %v544
        %v546 = vlaneseq
        %v547 = vshrl.u32 %v546, 7
        %v548 = vsub.s32 %v545, %v547
        %v549 = vrot.slane %v535, %v548
        %v550 = vcombine.low %v517, %v533
        %v551 = vcombine.high %v517, %v533
        %v553 = vunpack.c.l.s4 1934713408
        %v554 = vunpack.c.0.s8 %v553
        %v555 = vlaneseq
        %v556 = vshrl.u32 %v555, 7
        %v557 = vsub.s32 %v554, %v556
        %v558 = vrot.slane %v550, %v557
        %v560 = vunpack.c.l.s4 1934713408
        %v561 = vunpack.c.0.s8 %v560
        %v562 = vlaneseq
        %v563 = vshrl.u32 %v562, 7
        %v564 = vsub.s32 %v561, %v563
        %v565 = vrot.slane %v551, %v564
        %v566 = vcombine.high %v542, 0.0
        %v567 = vcombine.high %v549, 0.0
        %v568 = vcombine.high %v558, 0.0
        %v569 = vcombine.high %v565, 0.0
        %570 = vrot.lane.b32.xlu0 %v407, 64
        %v571 = vpop.permute.xlu0 %570
        %572 = vrot.lane.b32.xlu0 %v414, 64
        %v573 = vpop.permute.xlu0 %572
        %574 = vrot.lane.b32.xlu0 %v417, 64
        %v575 = vpop.permute.xlu0 %574
        %576 = vrot.lane.b32.xlu0 %v420, 64
        %v577 = vpop.permute.xlu0 %576
        %v582 = vcombine.low %v571, %v575
        %v583 = vcombine.high %v571, %v575
        %v585 = vunpack.c.l.s4 1983009808
        %v586 = vunpack.c.0.s8 %v585
        %v587 = vlaneseq
        %v588 = vshrl.u32 %v587, 7
        %v589 = vsub.s32 %v586, %v588
        %v590 = vrot.slane %v582, %v589
        %v592 = vunpack.c.l.s4 1983009808
        %v593 = vunpack.c.0.s8 %v592
        %v594 = vlaneseq
        %v595 = vshrl.u32 %v594, 7
        %v596 = vsub.s32 %v593, %v595
        %v597 = vrot.slane %v583, %v596
        %v598 = vcombine.low %v573, %v577
        %v599 = vcombine.high %v573, %v577
        %v601 = vunpack.c.l.s4 1983009808
        %v602 = vunpack.c.0.s8 %v601
        %v603 = vlaneseq
        %v604 = vshrl.u32 %v603, 7
        %v605 = vsub.s32 %v602, %v604
        %v606 = vrot.slane %v598, %v605
        %v608 = vunpack.c.l.s4 1983009808
        %v609 = vunpack.c.0.s8 %v608
        %v610 = vlaneseq
        %v611 = vshrl.u32 %v610, 7
        %v612 = vsub.s32 %v609, %v611
        %v613 = vrot.slane %v599, %v612
        %v614 = vcombine.low %v590, %v606
        %v615 = vcombine.high %v590, %v606
        %v617 = vunpack.c.l.s4 1934713408
        %v618 = vunpack.c.0.s8 %v617
        %v619 = vlaneseq
        %v620 = vshrl.u32 %v619, 7
        %v621 = vsub.s32 %v618, %v620
        %v622 = vrot.slane %v614, %v621
        %v624 = vunpack.c.l.s4 1934713408
        %v625 = vunpack.c.0.s8 %v624
        %v626 = vlaneseq
        %v627 = vshrl.u32 %v626, 7
        %v628 = vsub.s32 %v625, %v627
        %v629 = vrot.slane %v615, %v628
        %v630 = vcombine.low %v597, %v613
        %v631 = vcombine.high %v597, %v613
        %v633 = vunpack.c.l.s4 1934713408
        %v634 = vunpack.c.0.s8 %v633
        %v635 = vlaneseq
        %v636 = vshrl.u32 %v635, 7
        %v637 = vsub.s32 %v634, %v636
        %v638 = vrot.slane %v630, %v637
        %v640 = vunpack.c.l.s4 1934713408
        %v641 = vunpack.c.0.s8 %v640
        %v642 = vlaneseq
        %v643 = vshrl.u32 %v642, 7
        %v644 = vsub.s32 %v641, %v643
        %v645 = vrot.slane %v631, %v644
        %v646 = vcombine.high %v622, 0.0
        %v647 = vcombine.high %v629, 0.0
        %v648 = vcombine.high %v638, 0.0
        %v649 = vcombine.high %v645, 0.0
        %v650 = vpack.c.bf16 %v462, %v462
        %v651 = vpack.c.bf16 %v486, %v486
        %v652 = vpack.c.bf16 %v469, %v469
        %v653 = vpack.c.bf16 %v487, %v487
        %v654 = vpack.c.bf16 %v478, %v478
        %v655 = vpack.c.bf16 %v488, %v488
        %v656 = vpack.c.bf16 %v485, %v485
        %v657 = vpack.c.bf16 %v489, %v489
        %v658 = vpack.c.bf16 %v542, %v542
        %v659 = vpack.c.bf16 %v566, %v566
        %v660 = vpack.c.bf16 %v549, %v549
        %v661 = vpack.c.bf16 %v567, %v567
        %v662 = vpack.c.bf16 %v558, %v558
        %v663 = vpack.c.bf16 %v568, %v568
        %v664 = vpack.c.bf16 %v565, %v565
        %v665 = vpack.c.bf16 %v569, %v569
        %v666 = vcombine.low %v650, %v654
        %v668 = vunpack.c.l.s4 1983009808
        %v669 = vunpack.c.0.s8 %v668
        %v670 = vlaneseq
        %v671 = vshrl.u32 %v670, 7
        %v672 = vsub.s32 %v669, %v671
        %v673 = vrot.slane %v666, %v672
        %v674 = vcombine.low %v652, %v656
        %v676 = vunpack.c.l.s4 1983009808
        %v677 = vunpack.c.0.s8 %v676
        %v678 = vlaneseq
        %v679 = vshrl.u32 %v678, 7
        %v680 = vsub.s32 %v677, %v679
        %v681 = vrot.slane %v674, %v680
        %v682 = vcombine.low %v673, %v681
        %v684 = vunpack.c.l.s4 1934713408
        %v685 = vunpack.c.0.s8 %v684
        %v686 = vlaneseq
        %v687 = vshrl.u32 %v686, 7
        %v688 = vsub.s32 %v685, %v687
        %v689 = vrot.slane %v682, %v688
        %v690 = vcombine.high %v689, 0
        %v691 = vcombine.low %v651, %v655
        %v693 = vunpack.c.l.s4 1983009808
        %v694 = vunpack.c.0.s8 %v693
        %v695 = vlaneseq
        %v696 = vshrl.u32 %v695, 7
        %v697 = vsub.s32 %v694, %v696
        %v698 = vrot.slane %v691, %v697
        %v699 = vcombine.low %v653, %v657
        %v701 = vunpack.c.l.s4 1983009808
        %v702 = vunpack.c.0.s8 %v701
        %v703 = vlaneseq
        %v704 = vshrl.u32 %v703, 7
        %v705 = vsub.s32 %v702, %v704
        %v706 = vrot.slane %v699, %v705
        %v707 = vcombine.low %v698, %v706
        %v709 = vunpack.c.l.s4 1934713408
        %v710 = vunpack.c.0.s8 %v709
        %v711 = vlaneseq
        %v712 = vshrl.u32 %v711, 7
        %v713 = vsub.s32 %v710, %v712
        %v714 = vrot.slane %v707, %v713
        %v715 = vcombine.high %v714, 0
        %v718 = vpack.i.b16 %v714, %v689
        %v719 = vshrl.u32 %v689, 16
        %v720 = vshrl.u32 %v714, 16
        %v721 = vpack.i.b16 %v720, %v719
        %v724 = vpack.i.b16 %v715, %v690
        %v725 = vshrl.u32 %v690, 16
        %v726 = vshrl.u32 %v715, 16
        %v727 = vpack.i.b16 %v726, %v725
        %728 = vxpose.xlu0.c.b16.start [1/8] %v658, 128
        %729 = vxpose.xlu0.c.b16.cont [2/8] 0, 128
        %730 = vxpose.xlu0.c.b16.cont [3/8] 0, 128
        %731 = vxpose.xlu0.c.b16.cont [4/8] 0, 128
        %732 = vxpose.xlu0.c.b16.cont [5/8] 0, 128
        %733 = vxpose.xlu0.c.b16.cont [6/8] 0, 128
        %734 = vxpose.xlu0.c.b16.cont [7/8] 0, 128
        %735 = vxpose.xlu0.c.b16.end [8/8] 0, 128
        %v736 = vpop.trf.xlu0
        %v737 = vpop.trf.xlu0
        %v738 = vpop.trf.xlu0
        %v739 = vpop.trf.xlu0
        %v740 = vpop.trf.xlu0
        %v741 = vpop.trf.xlu0
        %v742 = vpop.trf.xlu0
        %v743 = vpop.trf.xlu0
        %744 = vxpose.xlu0.c.b16.start [1/8] %v659, 128
        %745 = vxpose.xlu0.c.b16.cont [2/8] 0, 128
        %746 = vxpose.xlu0.c.b16.cont [3/8] 0, 128
        %747 = vxpose.xlu0.c.b16.cont [4/8] 0, 128
        %748 = vxpose.xlu0.c.b16.cont [5/8] 0, 128
        %749 = vxpose.xlu0.c.b16.cont [6/8] 0, 128
        %750 = vxpose.xlu0.c.b16.cont [7/8] 0, 128
        %751 = vxpose.xlu0.c.b16.end [8/8] 0, 128
        %v752 = vpop.trf.xlu0
        %v753 = vpop.trf.xlu0
        %v754 = vpop.trf.xlu0
        %v755 = vpop.trf.xlu0
        %v756 = vpop.trf.xlu0
        %v757 = vpop.trf.xlu0
        %v758 = vpop.trf.xlu0
        %v759 = vpop.trf.xlu0
        %760 = vxpose.xlu0.c.b16.start [1/8] %v660, 128
        %761 = vxpose.xlu0.c.b16.cont [2/8] 0, 128
        %762 = vxpose.xlu0.c.b16.cont [3/8] 0, 128
        %763 = vxpose.xlu0.c.b16.cont [4/8] 0, 128
        %764 = vxpose.xlu0.c.b16.cont [5/8] 0, 128
        %765 = vxpose.xlu0.c.b16.cont [6/8] 0, 128
        %766 = vxpose.xlu0.c.b16.cont [7/8] 0, 128
        %767 = vxpose.xlu0.c.b16.end [8/8] 0, 128
        %v768 = vpop.trf.xlu0
        %v769 = vpop.trf.xlu0
        %v770 = vpop.trf.xlu0
        %v771 = vpop.trf.xlu0
        %v772 = vpop.trf.xlu0
        %v773 = vpop.trf.xlu0
        %v774 = vpop.trf.xlu0
        %v775 = vpop.trf.xlu0
        %776 = vxpose.xlu0.c.b16.start [1/8] %v661, 128
        %777 = vxpose.xlu0.c.b16.cont [2/8] 0, 128
        %778 = vxpose.xlu0.c.b16.cont [3/8] 0, 128
        %779 = vxpose.xlu0.c.b16.cont [4/8] 0, 128
        %780 = vxpose.xlu0.c.b16.cont [5/8] 0, 128
        %781 = vxpose.xlu0.c.b16.cont [6/8] 0, 128
        %782 = vxpose.xlu0.c.b16.cont [7/8] 0, 128
        %783 = vxpose.xlu0.c.b16.end [8/8] 0, 128
        %v784 = vpop.trf.xlu0
        %v785 = vpop.trf.xlu0
        %v786 = vpop.trf.xlu0
        %v787 = vpop.trf.xlu0
        %v788 = vpop.trf.xlu0
        %v789 = vpop.trf.xlu0
        %v790 = vpop.trf.xlu0
        %v791 = vpop.trf.xlu0
        %792 = vxpose.xlu0.c.b16.start [1/8] %v662, 128
        %793 = vxpose.xlu0.c.b16.cont [2/8] 0, 128
        %794 = vxpose.xlu0.c.b16.cont [3/8] 0, 128
        %795 = vxpose.xlu0.c.b16.cont [4/8] 0, 128
        %796 = vxpose.xlu0.c.b16.cont [5/8] 0, 128
        %797 = vxpose.xlu0.c.b16.cont [6/8] 0, 128
        %798 = vxpose.xlu0.c.b16.cont [7/8] 0, 128
        %799 = vxpose.xlu0.c.b16.end [8/8] 0, 128
        %v800 = vpop.trf.xlu0
        %v801 = vpop.trf.xlu0
        %v802 = vpop.trf.xlu0
        %v803 = vpop.trf.xlu0
        %v804 = vpop.trf.xlu0
        %v805 = vpop.trf.xlu0
        %v806 = vpop.trf.xlu0
        %v807 = vpop.trf.xlu0
        %808 = vxpose.xlu0.c.b16.start [1/8] %v663, 128
        %809 = vxpose.xlu0.c.b16.cont [2/8] 0, 128
        %810 = vxpose.xlu0.c.b16.cont [3/8] 0, 128
        %811 = vxpose.xlu0.c.b16.cont [4/8] 0, 128
        %812 = vxpose.xlu0.c.b16.cont [5/8] 0, 128
        %813 = vxpose.xlu0.c.b16.cont [6/8] 0, 128
        %814 = vxpose.xlu0.c.b16.cont [7/8] 0, 128
        %815 = vxpose.xlu0.c.b16.end [8/8] 0, 128
        %v816 = vpop.trf.xlu0
        %v817 = vpop.trf.xlu0
        %v818 = vpop.trf.xlu0
        %v819 = vpop.trf.xlu0
        %v820 = vpop.trf.xlu0
        %v821 = vpop.trf.xlu0
        %v822 = vpop.trf.xlu0
        %v823 = vpop.trf.xlu0
        %824 = vxpose.xlu0.c.b16.start [1/8] %v664, 128
        %825 = vxpose.xlu0.c.b16.cont [2/8] 0, 128
        %826 = vxpose.xlu0.c.b16.cont [3/8] 0, 128
        %827 = vxpose.xlu0.c.b16.cont [4/8] 0, 128
        %828 = vxpose.xlu0.c.b16.cont [5/8] 0, 128
        %829 = vxpose.xlu0.c.b16.cont [6/8] 0, 128
        %830 = vxpose.xlu0.c.b16.cont [7/8] 0, 128
        %831 = vxpose.xlu0.c.b16.end [8/8] 0, 128
        %v832 = vpop.trf.xlu0
        %v833 = vpop.trf.xlu0
        %v834 = vpop.trf.xlu0
        %v835 = vpop.trf.xlu0
        %v836 = vpop.trf.xlu0
        %v837 = vpop.trf.xlu0
        %v838 = vpop.trf.xlu0
        %v839 = vpop.trf.xlu0
        %840 = vxpose.xlu0.c.b16.start [1/8] %v665, 128
        %841 = vxpose.xlu0.c.b16.cont [2/8] 0, 128
        %842 = vxpose.xlu0.c.b16.cont [3/8] 0, 128
        %843 = vxpose.xlu0.c.b16.cont [4/8] 0, 128
        %844 = vxpose.xlu0.c.b16.cont [5/8] 0, 128
        %845 = vxpose.xlu0.c.b16.cont [6/8] 0, 128
        %846 = vxpose.xlu0.c.b16.cont [7/8] 0, 128
        %847 = vxpose.xlu0.c.b16.end [8/8] 0, 128
        %v848 = vpop.trf.xlu0
        %v849 = vpop.trf.xlu0
        %v850 = vpop.trf.xlu0
        %v851 = vpop.trf.xlu0
        %v852 = vpop.trf.xlu0
        %v853 = vpop.trf.xlu0
        %v854 = vpop.trf.xlu0
        %v855 = vpop.trf.xlu0
        %v856 = vcombine.low %v736, %v800
        %v858 = vunpack.c.l.s4 1983009808
        %v859 = vunpack.c.0.s8 %v858
        %v860 = vlaneseq
        %v861 = vshrl.u32 %v860, 7
        %v862 = vsub.s32 %v859, %v861
        %v863 = vrot.slane %v856, %v862
        %v864 = vcombine.low %v768, %v832
        %v866 = vunpack.c.l.s4 1983009808
        %v867 = vunpack.c.0.s8 %v866
        %v868 = vlaneseq
        %v869 = vshrl.u32 %v868, 7
        %v870 = vsub.s32 %v867, %v869
        %v871 = vrot.slane %v864, %v870
        %v872 = vcombine.low %v863, %v871
        %v873 = vcombine.high %v863, %v871
        %v875 = vunpack.c.l.s4 1934713408
        %v876 = vunpack.c.0.s8 %v875
        %v877 = vlaneseq
        %v878 = vshrl.u32 %v877, 7
        %v879 = vsub.s32 %v876, %v878
        %v880 = vrot.slane %v872, %v879
        %v882 = vunpack.c.l.s4 1934713408
        %v883 = vunpack.c.0.s8 %v882
        %v884 = vlaneseq
        %v885 = vshrl.u32 %v884, 7
        %v886 = vsub.s32 %v883, %v885
        %v887 = vrot.slane %v873, %v886
        %v888 = vcombine.high %v880, 0
        %v889 = vcombine.high %v887, 0
        %v890 = vcombine.low %v752, %v816
        %v892 = vunpack.c.l.s4 1983009808
        %v893 = vunpack.c.0.s8 %v892
        %v894 = vlaneseq
        %v895 = vshrl.u32 %v894, 7
        %v896 = vsub.s32 %v893, %v895
        %v897 = vrot.slane %v890, %v896
        %v898 = vcombine.low %v784, %v848
        %v900 = vunpack.c.l.s4 1983009808
        %v901 = vunpack.c.0.s8 %v900
        %v902 = vlaneseq
        %v903 = vshrl.u32 %v902, 7
        %v904 = vsub.s32 %v901, %v903
        %v905 = vrot.slane %v898, %v904
        %v906 = vcombine.low %v897, %v905
        %v907 = vcombine.high %v897, %v905
        %v909 = vunpack.c.l.s4 1934713408
        %v910 = vunpack.c.0.s8 %v909
        %v911 = vlaneseq
        %v912 = vshrl.u32 %v911, 7
        %v913 = vsub.s32 %v910, %v912
        %v914 = vrot.slane %v906, %v913
        %v916 = vunpack.c.l.s4 1934713408
        %v917 = vunpack.c.0.s8 %v916
        %v918 = vlaneseq
        %v919 = vshrl.u32 %v918, 7
        %v920 = vsub.s32 %v917, %v919
        %v921 = vrot.slane %v907, %v920
        %v922 = vcombine.high %v914, 0
        %v923 = vcombine.high %v921, 0
        %v926 = vpack.i.b16 %v914, %v880
        %v928 = vshrl.u32 %v880, 16
        %v929 = vshrl.u32 %v914, 16
        %v930 = vpack.i.b16 %v929, %v928
        %v934 = vpack.i.b16 %v922, %v888
        %v936 = vshrl.u32 %v888, 16
        %v937 = vshrl.u32 %v922, 16
        %v938 = vpack.i.b16 %v937, %v936
        %v942 = vpack.i.b16 %v921, %v887
        %v944 = vshrl.u32 %v887, 16
        %v945 = vshrl.u32 %v921, 16
        %v946 = vpack.i.b16 %v945, %v944
        %v950 = vpack.i.b16 %v923, %v889
        %v952 = vshrl.u32 %v889, 16
        %v953 = vshrl.u32 %v923, 16
        %v954 = vpack.i.b16 %v953, %v952
        %956 = vxpose.xlu0.c.b16.start [1/8] %v926, 128
        %957 = vxpose.xlu0.c.b16.cont [2/8] 0, 128
        %958 = vxpose.xlu0.c.b16.cont [3/8] 0, 128
        %959 = vxpose.xlu0.c.b16.cont [4/8] 0, 128
        %960 = vxpose.xlu0.c.b16.cont [5/8] 0, 128
        %961 = vxpose.xlu0.c.b16.cont [6/8] 0, 128
        %962 = vxpose.xlu0.c.b16.cont [7/8] 0, 128
        %963 = vxpose.xlu0.c.b16.end [8/8] 0, 128
        %v964 = vpop.trf.xlu0
        %v965 = vpop.trf.xlu0
        %v966 = vpop.trf.xlu0
        %v967 = vpop.trf.xlu0
        %v968 = vpop.trf.xlu0
        %v969 = vpop.trf.xlu0
        %v970 = vpop.trf.xlu0
        %v971 = vpop.trf.xlu0
        %972 = vxpose.xlu0.c.b16.start [1/8] %v930, 128
        %973 = vxpose.xlu0.c.b16.cont [2/8] 0, 128
        %974 = vxpose.xlu0.c.b16.cont [3/8] 0, 128
        %975 = vxpose.xlu0.c.b16.cont [4/8] 0, 128
        %976 = vxpose.xlu0.c.b16.cont [5/8] 0, 128
        %977 = vxpose.xlu0.c.b16.cont [6/8] 0, 128
        %978 = vxpose.xlu0.c.b16.cont [7/8] 0, 128
        %979 = vxpose.xlu0.c.b16.end [8/8] 0, 128
        %v980 = vpop.trf.xlu0
        %v981 = vpop.trf.xlu0
        %v982 = vpop.trf.xlu0
        %v983 = vpop.trf.xlu0
        %v984 = vpop.trf.xlu0
        %v985 = vpop.trf.xlu0
        %v986 = vpop.trf.xlu0
        %v987 = vpop.trf.xlu0
        %988 = vxpose.xlu0.c.b16.start [1/8] %v934, 128
        %989 = vxpose.xlu0.c.b16.cont [2/8] 0, 128
        %990 = vxpose.xlu0.c.b16.cont [3/8] 0, 128
        %991 = vxpose.xlu0.c.b16.cont [4/8] 0, 128
        %992 = vxpose.xlu0.c.b16.cont [5/8] 0, 128
        %993 = vxpose.xlu0.c.b16.cont [6/8] 0, 128
        %994 = vxpose.xlu0.c.b16.cont [7/8] 0, 128
        %995 = vxpose.xlu0.c.b16.end [8/8] 0, 128
        %v996 = vpop.trf.xlu0
        %v997 = vpop.trf.xlu0
        %v998 = vpop.trf.xlu0
        %v999 = vpop.trf.xlu0
        %v1000 = vpop.trf.xlu0
        %v1001 = vpop.trf.xlu0
        %v1002 = vpop.trf.xlu0
        %v1003 = vpop.trf.xlu0
        %1004 = vxpose.xlu0.c.b16.start [1/8] %v938, 128
        %1005 = vxpose.xlu0.c.b16.cont [2/8] 0, 128
        %1006 = vxpose.xlu0.c.b16.cont [3/8] 0, 128
        %1007 = vxpose.xlu0.c.b16.cont [4/8] 0, 128
        %1008 = vxpose.xlu0.c.b16.cont [5/8] 0, 128
        %1009 = vxpose.xlu0.c.b16.cont [6/8] 0, 128
        %1010 = vxpose.xlu0.c.b16.cont [7/8] 0, 128
        %1011 = vxpose.xlu0.c.b16.end [8/8] 0, 128
        %v1012 = vpop.trf.xlu0
        %v1013 = vpop.trf.xlu0
        %v1014 = vpop.trf.xlu0
        %v1015 = vpop.trf.xlu0
        %v1016 = vpop.trf.xlu0
        %v1017 = vpop.trf.xlu0
        %v1018 = vpop.trf.xlu0
        %v1019 = vpop.trf.xlu0
        %1020 = vxpose.xlu0.c.b16.start [1/8] %v942, 128
        %1021 = vxpose.xlu0.c.b16.cont [2/8] 0, 128
        %1022 = vxpose.xlu0.c.b16.cont [3/8] 0, 128
        %1023 = vxpose.xlu0.c.b16.cont [4/8] 0, 128
        %1024 = vxpose.xlu0.c.b16.cont [5/8] 0, 128
        %1025 = vxpose.xlu0.c.b16.cont [6/8] 0, 128
        %1026 = vxpose.xlu0.c.b16.cont [7/8] 0, 128
        %1027 = vxpose.xlu0.c.b16.end [8/8] 0, 128
        %v1028 = vpop.trf.xlu0
        %v1029 = vpop.trf.xlu0
        %v1030 = vpop.trf.xlu0
        %v1031 = vpop.trf.xlu0
        %v1032 = vpop.trf.xlu0
        %v1033 = vpop.trf.xlu0
        %v1034 = vpop.trf.xlu0
        %v1035 = vpop.trf.xlu0
        %1036 = vxpose.xlu0.c.b16.start [1/8] %v946, 128
        %1037 = vxpose.xlu0.c.b16.cont [2/8] 0, 128
        %1038 = vxpose.xlu0.c.b16.cont [3/8] 0, 128
        %1039 = vxpose.xlu0.c.b16.cont [4/8] 0, 128
        %1040 = vxpose.xlu0.c.b16.cont [5/8] 0, 128
        %1041 = vxpose.xlu0.c.b16.cont [6/8] 0, 128
        %1042 = vxpose.xlu0.c.b16.cont [7/8] 0, 128
        %1043 = vxpose.xlu0.c.b16.end [8/8] 0, 128
        %v1044 = vpop.trf.xlu0
        %v1045 = vpop.trf.xlu0
        %v1046 = vpop.trf.xlu0
        %v1047 = vpop.trf.xlu0
        %v1048 = vpop.trf.xlu0
        %v1049 = vpop.trf.xlu0
        %v1050 = vpop.trf.xlu0
        %v1051 = vpop.trf.xlu0
        %1052 = vxpose.xlu0.c.b16.start [1/8] %v950, 128
        %1053 = vxpose.xlu0.c.b16.cont [2/8] 0, 128
        %1054 = vxpose.xlu0.c.b16.cont [3/8] 0, 128
        %1055 = vxpose.xlu0.c.b16.cont [4/8] 0, 128
        %1056 = vxpose.xlu0.c.b16.cont [5/8] 0, 128
        %1057 = vxpose.xlu0.c.b16.cont [6/8] 0, 128
        %1058 = vxpose.xlu0.c.b16.cont [7/8] 0, 128
        %1059 = vxpose.xlu0.c.b16.end [8/8] 0, 128
        %v1060 = vpop.trf.xlu0
        %v1061 = vpop.trf.xlu0
        %v1062 = vpop.trf.xlu0
        %v1063 = vpop.trf.xlu0
        %v1064 = vpop.trf.xlu0
        %v1065 = vpop.trf.xlu0
        %v1066 = vpop.trf.xlu0
        %v1067 = vpop.trf.xlu0
        %1068 = vxpose.xlu0.c.b16.start [1/8] %v954, 128
        %1069 = vxpose.xlu0.c.b16.cont [2/8] 0, 128
        %1070 = vxpose.xlu0.c.b16.cont [3/8] 0, 128
        %1071 = vxpose.xlu0.c.b16.cont [4/8] 0, 128
        %1072 = vxpose.xlu0.c.b16.cont [5/8] 0, 128
        %1073 = vxpose.xlu0.c.b16.cont [6/8] 0, 128
        %1074 = vxpose.xlu0.c.b16.cont [7/8] 0, 128
        %1075 = vxpose.xlu0.c.b16.end [8/8] 0, 128
        %v1076 = vpop.trf.xlu0
        %v1077 = vpop.trf.xlu0
        %v1078 = vpop.trf.xlu0
        %v1079 = vpop.trf.xlu0
        %v1080 = vpop.trf.xlu0
        %v1081 = vpop.trf.xlu0
        %v1082 = vpop.trf.xlu0
        %v1083 = vpop.trf.xlu0
        %v1084 = vcombine.low %v964, %v1028
        %v1086 = vunpack.c.l.s4 1983009808
        %v1087 = vunpack.c.0.s8 %v1086
        %v1088 = vlaneseq
        %v1089 = vshrl.u32 %v1088, 7
        %v1090 = vsub.s32 %v1087, %v1089
        %v1091 = vrot.slane %v1084, %v1090
        %v1092 = vcombine.low %v996, %v1060
        %v1094 = vunpack.c.l.s4 1983009808
        %v1095 = vunpack.c.0.s8 %v1094
        %v1096 = vlaneseq
        %v1097 = vshrl.u32 %v1096, 7
        %v1098 = vsub.s32 %v1095, %v1097
        %v1099 = vrot.slane %v1092, %v1098
        %v1100 = vcombine.low %v1091, %v1099
        %v1102 = vunpack.c.l.s4 1934713408
        %v1103 = vunpack.c.0.s8 %v1102
        %v1104 = vlaneseq
        %v1105 = vshrl.u32 %v1104, 7
        %v1106 = vsub.s32 %v1103, %v1105
        %v1107 = vrot.slane %v1100, %v1106
        %v1108 = vcombine.high %v1107, 0
        %v1109 = vcombine.low %v980, %v1044
        %v1111 = vunpack.c.l.s4 1983009808
        %v1112 = vunpack.c.0.s8 %v1111
        %v1113 = vlaneseq
        %v1114 = vshrl.u32 %v1113, 7
        %v1115 = vsub.s32 %v1112, %v1114
        %v1116 = vrot.slane %v1109, %v1115
        %v1117 = vcombine.low %v1012, %v1076
        %v1119 = vunpack.c.l.s4 1983009808
        %v1120 = vunpack.c.0.s8 %v1119
        %v1121 = vlaneseq
        %v1122 = vshrl.u32 %v1121, 7
        %v1123 = vsub.s32 %v1120, %v1122
        %v1124 = vrot.slane %v1117, %v1123
        %v1125 = vcombine.low %v1116, %v1124
        %v1127 = vunpack.c.l.s4 1934713408
        %v1128 = vunpack.c.0.s8 %v1127
        %v1129 = vlaneseq
        %v1130 = vshrl.u32 %v1129, 7
        %v1131 = vsub.s32 %v1128, %v1130
        %v1132 = vrot.slane %v1125, %v1131
        %v1133 = vcombine.high %v1132, 0
        %v1136 = vpack.i.b16 %v1132, %v1107
        %v1137 = vshrl.u32 %v1107, 16
        %v1138 = vshrl.u32 %v1132, 16
        %v1139 = vpack.i.b16 %v1138, %v1137
        %v1142 = vpack.i.b16 %v1133, %v1108
        %v1143 = vshrl.u32 %v1108, 16
        %v1144 = vshrl.u32 %v1133, 16
        %v1145 = vpack.i.b16 %v1144, %v1143
        %vm1146 = vcmask 64512
        %v1148 = vsel %vm1146, %v718, 0
        %vm1150 = vcmask 1043456
        %v1152 = vsel %vm1150, %v1136, 0
        %1154 = vmatprep.subr.bf16.mxu0 0
        %1155 = vmatpush1.bf16.msra.mxu0 %v1152
        %1156 = vmatprep.subr.bf16.mxu0 0
        %1157 = vmatpush1.bf16.msra.mxu0 0
        %1158 = vmatprep.subr.bf16.mxu0 0
        %1159 = vmatpush1.bf16.msra.mxu0 0
        %1160 = vmatprep.subr.bf16.mxu0 0
        %1161 = vmatpush1.bf16.msra.mxu0 0
        %1162 = vmatprep.subr.bf16.mxu0 0
        %1163 = vmatpush1.bf16.msra.mxu0 0
        %1164 = vmatprep.subr.bf16.mxu0 0
        %1165 = vmatpush1.bf16.msra.mxu0 0
        %1166 = vmatprep.subr.bf16.mxu0 0
        %1167 = vmatpush1.bf16.msra.mxu0 0
        %1168 = vmatprep.subr.bf16.mxu0 0
        %1169 = vmatpush1.bf16.msra.mxu0 0
        %1170 = vmatprep.subr.bf16.mxu0 0
        %1171 = vmatpush1.bf16.msra.mxu0 0
        %1172 = vmatprep.subr.bf16.mxu0 0
        %1173 = vmatpush1.bf16.msra.mxu0 0
        %1174 = vmatprep.subr.bf16.mxu0 0
        %1175 = vmatpush1.bf16.msra.mxu0 0
        %1176 = vmatprep.subr.bf16.mxu0 0
        %1177 = vmatpush1.bf16.msra.mxu0 0
        %1178 = vmatprep.subr.bf16.mxu0 0
        %1179 = vmatpush1.bf16.msra.mxu0 0
        %1180 = vmatprep.subr.bf16.mxu0 0
        %1181 = vmatpush1.bf16.msra.mxu0 0
        %1182 = vmatprep.subr.bf16.mxu0 0
        %1183 = vmatpush1.bf16.msra.mxu0 0
        %1184 = vmatprep.subr.bf16.mxu0 0
        %1185 = vmatpush1.bf16.msra.mxu0 0
        %1186 = vmatprep.mubr.bf16.mxu0 0
        %1187 = vmatmul.mubr.bf16.gmra.mrb[0].mxu0 %v1148
        %v1188 = vpop.f32.mrb[0].mxu0
        %v1189 = vadd.f32 0.0, %v1188
        %v1190 = vpop.f32.mrb[0].mxu0
        %v1191 = vpop.f32.mrb[0].mxu0
        %v1192 = vpop.f32.mrb[0].mxu0
        %1193 = vdwg.mxu0
        %v1195 = vsel %vm1146, %v721, 0
        %v1198 = vsel %vm1150, %v1139, 0
        %1200 = vmatprep.subr.bf16.mxu0 0
        %1201 = vmatpush1.bf16.msra.mxu0 %v1198
        %1202 = vmatprep.subr.bf16.mxu0 0
        %1203 = vmatpush1.bf16.msra.mxu0 0
        %1204 = vmatprep.subr.bf16.mxu0 0
        %1205 = vmatpush1.bf16.msra.mxu0 0
        %1206 = vmatprep.subr.bf16.mxu0 0
        %1207 = vmatpush1.bf16.msra.mxu0 0
        %1208 = vmatprep.subr.bf16.mxu0 0
        %1209 = vmatpush1.bf16.msra.mxu0 0
        %1210 = vmatprep.subr.bf16.mxu0 0
        %1211 = vmatpush1.bf16.msra.mxu0 0
        %1212 = vmatprep.subr.bf16.mxu0 0
        %1213 = vmatpush1.bf16.msra.mxu0 0
        %1214 = vmatprep.subr.bf16.mxu0 0
        %1215 = vmatpush1.bf16.msra.mxu0 0
        %1216 = vmatprep.subr.bf16.mxu0 0
        %1217 = vmatpush1.bf16.msra.mxu0 0
        %1218 = vmatprep.subr.bf16.mxu0 0
        %1219 = vmatpush1.bf16.msra.mxu0 0
        %1220 = vmatprep.subr.bf16.mxu0 0
        %1221 = vmatpush1.bf16.msra.mxu0 0
        %1222 = vmatprep.subr.bf16.mxu0 0
        %1223 = vmatpush1.bf16.msra.mxu0 0
        %1224 = vmatprep.subr.bf16.mxu0 0
        %1225 = vmatpush1.bf16.msra.mxu0 0
        %1226 = vmatprep.subr.bf16.mxu0 0
        %1227 = vmatpush1.bf16.msra.mxu0 0
        %1228 = vmatprep.subr.bf16.mxu0 0
        %1229 = vmatpush1.bf16.msra.mxu0 0
        %1230 = vmatprep.subr.bf16.mxu0 0
        %1231 = vmatpush1.bf16.msra.mxu0 0
        %1232 = vmatprep.mubr.bf16.mxu0 0
        %1233 = vmatmul.mubr.bf16.gmra.mrb[0].mxu0 %v1195
        %v1234 = vpop.f32.mrb[0].mxu0
        %v1235 = vadd.f32 0.0, %v1234
        %v1236 = vpop.f32.mrb[0].mxu0
        %v1237 = vpop.f32.mrb[0].mxu0
        %v1238 = vpop.f32.mrb[0].mxu0
        %1239 = vdwg.mxu0
        %v1241 = vsel %vm1146, %v724, 0
        %v1244 = vsel %vm1150, %v1142, 0
        %1246 = vmatprep.subr.bf16.mxu0 0
        %1247 = vmatpush1.bf16.msra.mxu0 %v1244
        %1248 = vmatprep.subr.bf16.mxu0 0
        %1249 = vmatpush1.bf16.msra.mxu0 0
        %1250 = vmatprep.subr.bf16.mxu0 0
        %1251 = vmatpush1.bf16.msra.mxu0 0
        %1252 = vmatprep.subr.bf16.mxu0 0
        %1253 = vmatpush1.bf16.msra.mxu0 0
        %1254 = vmatprep.subr.bf16.mxu0 0
        %1255 = vmatpush1.bf16.msra.mxu0 0
        %1256 = vmatprep.subr.bf16.mxu0 0
        %1257 = vmatpush1.bf16.msra.mxu0 0
        %1258 = vmatprep.subr.bf16.mxu0 0
        %1259 = vmatpush1.bf16.msra.mxu0 0
        %1260 = vmatprep.subr.bf16.mxu0 0
        %1261 = vmatpush1.bf16.msra.mxu0 0
        %1262 = vmatprep.subr.bf16.mxu0 0
        %1263 = vmatpush1.bf16.msra.mxu0 0
        %1264 = vmatprep.subr.bf16.mxu0 0
        %1265 = vmatpush1.bf16.msra.mxu0 0
        %1266 = vmatprep.subr.bf16.mxu0 0
        %1267 = vmatpush1.bf16.msra.mxu0 0
        %1268 = vmatprep.subr.bf16.mxu0 0
        %1269 = vmatpush1.bf16.msra.mxu0 0
        %1270 = vmatprep.subr.bf16.mxu0 0
        %1271 = vmatpush1.bf16.msra.mxu0 0
        %1272 = vmatprep.subr.bf16.mxu0 0
        %1273 = vmatpush1.bf16.msra.mxu0 0
        %1274 = vmatprep.subr.bf16.mxu0 0
        %1275 = vmatpush1.bf16.msra.mxu0 0
        %1276 = vmatprep.subr.bf16.mxu0 0
        %1277 = vmatpush1.bf16.msra.mxu0 0
        %1278 = vmatprep.mubr.bf16.mxu0 0
        %1279 = vmatmul.mubr.bf16.gmra.mrb[0].mxu0 %v1241
        %v1280 = vpop.f32.mrb[0].mxu0
        %v1281 = vadd.f32 0.0, %v1280
        %v1282 = vpop.f32.mrb[0].mxu0
        %v1283 = vpop.f32.mrb[0].mxu0
        %v1284 = vpop.f32.mrb[0].mxu0
        %1285 = vdwg.mxu0
        %v1287 = vsel %vm1146, %v727, 0
        %v1290 = vsel %vm1150, %v1145, 0
        %1292 = vmatprep.subr.bf16.mxu0 0
        %1293 = vmatpush1.bf16.msra.mxu0 %v1290
        %1294 = vmatprep.subr.bf16.mxu0 0
        %1295 = vmatpush1.bf16.msra.mxu0 0
        %1296 = vmatprep.subr.bf16.mxu0 0
        %1297 = vmatpush1.bf16.msra.mxu0 0
        %1298 = vmatprep.subr.bf16.mxu0 0
        %1299 = vmatpush1.bf16.msra.mxu0 0
        %1300 = vmatprep.subr.bf16.mxu0 0
        %1301 = vmatpush1.bf16.msra.mxu0 0
        %1302 = vmatprep.subr.bf16.mxu0 0
        %1303 = vmatpush1.bf16.msra.mxu0 0
        %1304 = vmatprep.subr.bf16.mxu0 0
        %1305 = vmatpush1.bf16.msra.mxu0 0
        %1306 = vmatprep.subr.bf16.mxu0 0
        %1307 = vmatpush1.bf16.msra.mxu0 0
        %1308 = vmatprep.subr.bf16.mxu0 0
        %1309 = vmatpush1.bf16.msra.mxu0 0
        %1310 = vmatprep.subr.bf16.mxu0 0
        %1311 = vmatpush1.bf16.msra.mxu0 0
        %1312 = vmatprep.subr.bf16.mxu0 0
        %1313 = vmatpush1.bf16.msra.mxu0 0
        %1314 = vmatprep.subr.bf16.mxu0 0
        %1315 = vmatpush1.bf16.msra.mxu0 0
        %1316 = vmatprep.subr.bf16.mxu0 0
        %1317 = vmatpush1.bf16.msra.mxu0 0
        %1318 = vmatprep.subr.bf16.mxu0 0
        %1319 = vmatpush1.bf16.msra.mxu0 0
        %1320 = vmatprep.subr.bf16.mxu0 0
        %1321 = vmatpush1.bf16.msra.mxu0 0
        %1322 = vmatprep.subr.bf16.mxu0 0
        %1323 = vmatpush1.bf16.msra.mxu0 0
        %1324 = vmatprep.mubr.bf16.mxu0 0
        %1325 = vmatmul.mubr.bf16.gmra.mrb[0].mxu0 %v1287
        %v1326 = vpop.f32.mrb[0].mxu0
        %v1327 = vadd.f32 0.0, %v1326
        %v1328 = vpop.f32.mrb[0].mxu0
        %v1329 = vpop.f32.mrb[0].mxu0
        %v1330 = vpop.f32.mrb[0].mxu0
        %1331 = vdwg.mxu0
        %v1332 = vsel %vm1146, %v1189, -inf
        %1333 = vmax.xlane.f32.xlu0 %v1332
        %v1334 = vpop.xlane.xlu0 %1333
        %v1335 = vsel %vm1146, %v1235, -inf
        %1336 = vmax.xlane.f32.xlu0 %v1335
        %v1337 = vpop.xlane.xlu0 %1336
        %v1338 = vsel %vm1146, %v1281, -inf
        %1339 = vmax.xlane.f32.xlu0 %v1338
        %v1340 = vpop.xlane.xlu0 %1339
        %v1341 = vsel %vm1146, %v1327, -inf
        %1342 = vmax.xlane.f32.xlu0 %v1341
        %v1343 = vpop.xlane.xlu0 %1342
        %v1344 = vsub.f32 %v1189, %v1334
        %v1345 = vsub.f32 %v1235, %v1337
        %v1346 = vsub.f32 %v1281, %v1340
        %v1347 = vsub.f32 %v1327, %v1343
        %v1348 = vmul.f32 %v1344, 1.442695
        %v1349 = vpow.pop %v1348
        %v1350 = vmul.f32 %v1345, 1.442695
        %v1351 = vpow.pop %v1350
        %v1352 = vmul.f32 %v1346, 1.442695
        %v1353 = vpow.pop %v1352
        %v1354 = vmul.f32 %v1347, 1.442695
        %v1355 = vpow.pop %v1354
        %v1356 = vsel %vm1146, %v1349, 0.0
        %1357 = vadd.xlane.f32.xlu0 %v1356
        %v1358 = vpop.xlane.xlu0 %1357
        %v1359 = vsel %vm1146, %v1351, 0.0
        %1360 = vadd.xlane.f32.xlu0 %v1359
        %v1361 = vpop.xlane.xlu0 %1360
        %v1362 = vsel %vm1146, %v1353, 0.0
        %1363 = vadd.xlane.f32.xlu0 %v1362
        %v1364 = vpop.xlane.xlu0 %1363
        %v1365 = vsel %vm1146, %v1355, 0.0
        %1366 = vadd.xlane.f32.xlu0 %v1365
        %v1367 = vpop.xlane.xlu0 %1366
        %v1368 = vrcp.pop %v1358
        %v1369 = vrcp.pop %v1361
        %v1370 = vrcp.pop %v1364
        %v1371 = vrcp.pop %v1367
        %v1372 = vmul.f32 %v1349, %v1368
        %v1373 = vmul.f32 %v1351, %v1369
        %v1374 = vmul.f32 %v1353, %v1370
        %v1375 = vmul.f32 %v1355, %v1371
        %v1376 = vpack.c.bf16 %v1372, %v1372
        %v1377 = vpack.c.bf16 %v1373, %v1373
        %v1378 = vpack.c.bf16 %v1374, %v1374
        %v1379 = vpack.c.bf16 %v1375, %v1375
        %v1380 = vpack.c.bf16 %v622, %v622
        %v1381 = vpack.c.bf16 %v646, %v646
        %v1382 = vpack.c.bf16 %v629, %v629
        %v1383 = vpack.c.bf16 %v647, %v647
        %v1384 = vpack.c.bf16 %v638, %v638
        %v1385 = vpack.c.bf16 %v648, %v648
        %v1386 = vpack.c.bf16 %v645, %v645
        %v1387 = vpack.c.bf16 %v649, %v649
        %1388 = vxpose.xlu0.c.b16.start [1/8] %v1380, 128
        %1389 = vxpose.xlu0.c.b16.cont [2/8] 0, 128
        %1390 = vxpose.xlu0.c.b16.cont [3/8] 0, 128
        %1391 = vxpose.xlu0.c.b16.cont [4/8] 0, 128
        %1392 = vxpose.xlu0.c.b16.cont [5/8] 0, 128
        %1393 = vxpose.xlu0.c.b16.cont [6/8] 0, 128
        %1394 = vxpose.xlu0.c.b16.cont [7/8] 0, 128
        %1395 = vxpose.xlu0.c.b16.end [8/8] 0, 128
        %v1396 = vpop.trf.xlu0
        %v1397 = vpop.trf.xlu0
        %v1398 = vpop.trf.xlu0
        %v1399 = vpop.trf.xlu0
        %v1400 = vpop.trf.xlu0
        %v1401 = vpop.trf.xlu0
        %v1402 = vpop.trf.xlu0
        %v1403 = vpop.trf.xlu0
        %1404 = vxpose.xlu0.c.b16.start [1/8] %v1381, 128
        %1405 = vxpose.xlu0.c.b16.cont [2/8] 0, 128
        %1406 = vxpose.xlu0.c.b16.cont [3/8] 0, 128
        %1407 = vxpose.xlu0.c.b16.cont [4/8] 0, 128
        %1408 = vxpose.xlu0.c.b16.cont [5/8] 0, 128
        %1409 = vxpose.xlu0.c.b16.cont [6/8] 0, 128
        %1410 = vxpose.xlu0.c.b16.cont [7/8] 0, 128
        %1411 = vxpose.xlu0.c.b16.end [8/8] 0, 128
        %v1412 = vpop.trf.xlu0
        %v1413 = vpop.trf.xlu0
        %v1414 = vpop.trf.xlu0
        %v1415 = vpop.trf.xlu0
        %v1416 = vpop.trf.xlu0
        %v1417 = vpop.trf.xlu0
        %v1418 = vpop.trf.xlu0
        %v1419 = vpop.trf.xlu0
        %1420 = vxpose.xlu0.c.b16.start [1/8] %v1382, 128
        %1421 = vxpose.xlu0.c.b16.cont [2/8] 0, 128
        %1422 = vxpose.xlu0.c.b16.cont [3/8] 0, 128
        %1423 = vxpose.xlu0.c.b16.cont [4/8] 0, 128
        %1424 = vxpose.xlu0.c.b16.cont [5/8] 0, 128
        %1425 = vxpose.xlu0.c.b16.cont [6/8] 0, 128
        %1426 = vxpose.xlu0.c.b16.cont [7/8] 0, 128
        %1427 = vxpose.xlu0.c.b16.end [8/8] 0, 128
        %v1428 = vpop.trf.xlu0
        %v1429 = vpop.trf.xlu0
        %v1430 = vpop.trf.xlu0
        %v1431 = vpop.trf.xlu0
        %v1432 = vpop.trf.xlu0
        %v1433 = vpop.trf.xlu0
        %v1434 = vpop.trf.xlu0
        %v1435 = vpop.trf.xlu0
        %1436 = vxpose.xlu0.c.b16.start [1/8] %v1383, 128
        %1437 = vxpose.xlu0.c.b16.cont [2/8] 0, 128
        %1438 = vxpose.xlu0.c.b16.cont [3/8] 0, 128
        %1439 = vxpose.xlu0.c.b16.cont [4/8] 0, 128
        %1440 = vxpose.xlu0.c.b16.cont [5/8] 0, 128
        %1441 = vxpose.xlu0.c.b16.cont [6/8] 0, 128
        %1442 = vxpose.xlu0.c.b16.cont [7/8] 0, 128
        %1443 = vxpose.xlu0.c.b16.end [8/8] 0, 128
        %v1444 = vpop.trf.xlu0
        %v1445 = vpop.trf.xlu0
        %v1446 = vpop.trf.xlu0
        %v1447 = vpop.trf.xlu0
        %v1448 = vpop.trf.xlu0
        %v1449 = vpop.trf.xlu0
        %v1450 = vpop.trf.xlu0
        %v1451 = vpop.trf.xlu0
        %1452 = vxpose.xlu0.c.b16.start [1/8] %v1384, 128
        %1453 = vxpose.xlu0.c.b16.cont [2/8] 0, 128
        %1454 = vxpose.xlu0.c.b16.cont [3/8] 0, 128
        %1455 = vxpose.xlu0.c.b16.cont [4/8] 0, 128
        %1456 = vxpose.xlu0.c.b16.cont [5/8] 0, 128
        %1457 = vxpose.xlu0.c.b16.cont [6/8] 0, 128
        %1458 = vxpose.xlu0.c.b16.cont [7/8] 0, 128
        %1459 = vxpose.xlu0.c.b16.end [8/8] 0, 128
        %v1460 = vpop.trf.xlu0
        %v1461 = vpop.trf.xlu0
        %v1462 = vpop.trf.xlu0
        %v1463 = vpop.trf.xlu0
        %v1464 = vpop.trf.xlu0
        %v1465 = vpop.trf.xlu0
        %v1466 = vpop.trf.xlu0
        %v1467 = vpop.trf.xlu0
        %1468 = vxpose.xlu0.c.b16.start [1/8] %v1385, 128
        %1469 = vxpose.xlu0.c.b16.cont [2/8] 0, 128
        %1470 = vxpose.xlu0.c.b16.cont [3/8] 0, 128
        %1471 = vxpose.xlu0.c.b16.cont [4/8] 0, 128
        %1472 = vxpose.xlu0.c.b16.cont [5/8] 0, 128
        %1473 = vxpose.xlu0.c.b16.cont [6/8] 0, 128
        %1474 = vxpose.xlu0.c.b16.cont [7/8] 0, 128
        %1475 = vxpose.xlu0.c.b16.end [8/8] 0, 128
        %v1476 = vpop.trf.xlu0
        %v1477 = vpop.trf.xlu0
        %v1478 = vpop.trf.xlu0
        %v1479 = vpop.trf.xlu0
        %v1480 = vpop.trf.xlu0
        %v1481 = vpop.trf.xlu0
        %v1482 = vpop.trf.xlu0
        %v1483 = vpop.trf.xlu0
        %1484 = vxpose.xlu0.c.b16.start [1/8] %v1386, 128
        %1485 = vxpose.xlu0.c.b16.cont [2/8] 0, 128
        %1486 = vxpose.xlu0.c.b16.cont [3/8] 0, 128
        %1487 = vxpose.xlu0.c.b16.cont [4/8] 0, 128
        %1488 = vxpose.xlu0.c.b16.cont [5/8] 0, 128
        %1489 = vxpose.xlu0.c.b16.cont [6/8] 0, 128
        %1490 = vxpose.xlu0.c.b16.cont [7/8] 0, 128
        %1491 = vxpose.xlu0.c.b16.end [8/8] 0, 128
        %v1492 = vpop.trf.xlu0
        %v1493 = vpop.trf.xlu0
        %v1494 = vpop.trf.xlu0
        %v1495 = vpop.trf.xlu0
        %v1496 = vpop.trf.xlu0
        %v1497 = vpop.trf.xlu0
        %v1498 = vpop.trf.xlu0
        %v1499 = vpop.trf.xlu0
        %1500 = vxpose.xlu0.c.b16.start [1/8] %v1387, 128
        %1501 = vxpose.xlu0.c.b16.cont [2/8] 0, 128
        %1502 = vxpose.xlu0.c.b16.cont [3/8] 0, 128
        %1503 = vxpose.xlu0.c.b16.cont [4/8] 0, 128
        %1504 = vxpose.xlu0.c.b16.cont [5/8] 0, 128
        %1505 = vxpose.xlu0.c.b16.cont [6/8] 0, 128
        %1506 = vxpose.xlu0.c.b16.cont [7/8] 0, 128
        %1507 = vxpose.xlu0.c.b16.end [8/8] 0, 128
        %v1508 = vpop.trf.xlu0
        %v1509 = vpop.trf.xlu0
        %v1510 = vpop.trf.xlu0
        %v1511 = vpop.trf.xlu0
        %v1512 = vpop.trf.xlu0
        %v1513 = vpop.trf.xlu0
        %v1514 = vpop.trf.xlu0
        %v1515 = vpop.trf.xlu0
        %v1516 = vcombine.low %v1396, %v1460
        %v1518 = vunpack.c.l.s4 1983009808
        %v1519 = vunpack.c.0.s8 %v1518
        %v1520 = vlaneseq
        %v1521 = vshrl.u32 %v1520, 7
        %v1522 = vsub.s32 %v1519, %v1521
        %v1523 = vrot.slane %v1516, %v1522
        %v1524 = vcombine.low %v1428, %v1492
        %v1526 = vunpack.c.l.s4 1983009808
        %v1527 = vunpack.c.0.s8 %v1526
        %v1528 = vlaneseq
        %v1529 = vshrl.u32 %v1528, 7
        %v1530 = vsub.s32 %v1527, %v1529
        %v1531 = vrot.slane %v1524, %v1530
        %v1532 = vcombine.low %v1523, %v1531
        %v1533 = vcombine.high %v1523, %v1531
        %v1535 = vunpack.c.l.s4 1934713408
        %v1536 = vunpack.c.0.s8 %v1535
        %v1537 = vlaneseq
        %v1538 = vshrl.u32 %v1537, 7
        %v1539 = vsub.s32 %v1536, %v1538
        %v1540 = vrot.slane %v1532, %v1539
        %v1542 = vunpack.c.l.s4 1934713408
        %v1543 = vunpack.c.0.s8 %v1542
        %v1544 = vlaneseq
        %v1545 = vshrl.u32 %v1544, 7
        %v1546 = vsub.s32 %v1543, %v1545
        %v1547 = vrot.slane %v1533, %v1546
        %v1548 = vcombine.high %v1540, 0
        %v1549 = vcombine.high %v1547, 0
        %v1550 = vcombine.low %v1412, %v1476
        %v1552 = vunpack.c.l.s4 1983009808
        %v1553 = vunpack.c.0.s8 %v1552
        %v1554 = vlaneseq
        %v1555 = vshrl.u32 %v1554, 7
        %v1556 = vsub.s32 %v1553, %v1555
        %v1557 = vrot.slane %v1550, %v1556
        %v1558 = vcombine.low %v1444, %v1508
        %v1560 = vunpack.c.l.s4 1983009808
        %v1561 = vunpack.c.0.s8 %v1560
        %v1562 = vlaneseq
        %v1563 = vshrl.u32 %v1562, 7
        %v1564 = vsub.s32 %v1561, %v1563
        %v1565 = vrot.slane %v1558, %v1564
        %v1566 = vcombine.low %v1557, %v1565
        %v1567 = vcombine.high %v1557, %v1565
        %v1569 = vunpack.c.l.s4 1934713408
        %v1570 = vunpack.c.0.s8 %v1569
        %v1571 = vlaneseq
        %v1572 = vshrl.u32 %v1571, 7
        %v1573 = vsub.s32 %v1570, %v1572
        %v1574 = vrot.slane %v1566, %v1573
        %v1576 = vunpack.c.l.s4 1934713408
        %v1577 = vunpack.c.0.s8 %v1576
        %v1578 = vlaneseq
        %v1579 = vshrl.u32 %v1578, 7
        %v1580 = vsub.s32 %v1577, %v1579
        %v1581 = vrot.slane %v1567, %v1580
        %v1582 = vcombine.high %v1574, 0
        %v1583 = vcombine.high %v1581, 0
        %v1586 = vpack.i.b16 %v1574, %v1540
        %v1588 = vshrl.u32 %v1540, 16
        %v1589 = vshrl.u32 %v1574, 16
        %v1590 = vpack.i.b16 %v1589, %v1588
        %v1594 = vpack.i.b16 %v1582, %v1548
        %v1596 = vshrl.u32 %v1548, 16
        %v1597 = vshrl.u32 %v1582, 16
        %v1598 = vpack.i.b16 %v1597, %v1596
        %v1602 = vpack.i.b16 %v1581, %v1547
        %v1604 = vshrl.u32 %v1547, 16
        %v1605 = vshrl.u32 %v1581, 16
        %v1606 = vpack.i.b16 %v1605, %v1604
        %v1610 = vpack.i.b16 %v1583, %v1549
        %v1612 = vshrl.u32 %v1549, 16
        %v1613 = vshrl.u32 %v1583, 16
        %v1614 = vpack.i.b16 %v1613, %v1612
        %1616 = vxpose.xlu0.c.b16.start [1/8] %v1586, 128
        %1617 = vxpose.xlu0.c.b16.cont [2/8] 0, 128
        %1618 = vxpose.xlu0.c.b16.cont [3/8] 0, 128
        %1619 = vxpose.xlu0.c.b16.cont [4/8] 0, 128
        %1620 = vxpose.xlu0.c.b16.cont [5/8] 0, 128
        %1621 = vxpose.xlu0.c.b16.cont [6/8] 0, 128
        %1622 = vxpose.xlu0.c.b16.cont [7/8] 0, 128
        %1623 = vxpose.xlu0.c.b16.end [8/8] 0, 128
        %v1624 = vpop.trf.xlu0
        %v1625 = vpop.trf.xlu0
        %v1626 = vpop.trf.xlu0
        %v1627 = vpop.trf.xlu0
        %v1628 = vpop.trf.xlu0
        %v1629 = vpop.trf.xlu0
        %v1630 = vpop.trf.xlu0
        %v1631 = vpop.trf.xlu0
        %1632 = vxpose.xlu0.c.b16.start [1/8] %v1590, 128
        %1633 = vxpose.xlu0.c.b16.cont [2/8] 0, 128
        %1634 = vxpose.xlu0.c.b16.cont [3/8] 0, 128
        %1635 = vxpose.xlu0.c.b16.cont [4/8] 0, 128
        %1636 = vxpose.xlu0.c.b16.cont [5/8] 0, 128
        %1637 = vxpose.xlu0.c.b16.cont [6/8] 0, 128
        %1638 = vxpose.xlu0.c.b16.cont [7/8] 0, 128
        %1639 = vxpose.xlu0.c.b16.end [8/8] 0, 128
        %v1640 = vpop.trf.xlu0
        %v1641 = vpop.trf.xlu0
        %v1642 = vpop.trf.xlu0
        %v1643 = vpop.trf.xlu0
        %v1644 = vpop.trf.xlu0
        %v1645 = vpop.trf.xlu0
        %v1646 = vpop.trf.xlu0
        %v1647 = vpop.trf.xlu0
        %1648 = vxpose.xlu0.c.b16.start [1/8] %v1594, 128
        %1649 = vxpose.xlu0.c.b16.cont [2/8] 0, 128
        %1650 = vxpose.xlu0.c.b16.cont [3/8] 0, 128
        %1651 = vxpose.xlu0.c.b16.cont [4/8] 0, 128
        %1652 = vxpose.xlu0.c.b16.cont [5/8] 0, 128
        %1653 = vxpose.xlu0.c.b16.cont [6/8] 0, 128
        %1654 = vxpose.xlu0.c.b16.cont [7/8] 0, 128
        %1655 = vxpose.xlu0.c.b16.end [8/8] 0, 128
        %v1656 = vpop.trf.xlu0
        %v1657 = vpop.trf.xlu0
        %v1658 = vpop.trf.xlu0
        %v1659 = vpop.trf.xlu0
        %v1660 = vpop.trf.xlu0
        %v1661 = vpop.trf.xlu0
        %v1662 = vpop.trf.xlu0
        %v1663 = vpop.trf.xlu0
        %1664 = vxpose.xlu0.c.b16.start [1/8] %v1598, 128
        %1665 = vxpose.xlu0.c.b16.cont [2/8] 0, 128
        %1666 = vxpose.xlu0.c.b16.cont [3/8] 0, 128
        %1667 = vxpose.xlu0.c.b16.cont [4/8] 0, 128
        %1668 = vxpose.xlu0.c.b16.cont [5/8] 0, 128
        %1669 = vxpose.xlu0.c.b16.cont [6/8] 0, 128
        %1670 = vxpose.xlu0.c.b16.cont [7/8] 0, 128
        %1671 = vxpose.xlu0.c.b16.end [8/8] 0, 128
        %v1672 = vpop.trf.xlu0
        %v1673 = vpop.trf.xlu0
        %v1674 = vpop.trf.xlu0
        %v1675 = vpop.trf.xlu0
        %v1676 = vpop.trf.xlu0
        %v1677 = vpop.trf.xlu0
        %v1678 = vpop.trf.xlu0
        %v1679 = vpop.trf.xlu0
        %1680 = vxpose.xlu0.c.b16.start [1/8] %v1602, 128
        %1681 = vxpose.xlu0.c.b16.cont [2/8] 0, 128
        %1682 = vxpose.xlu0.c.b16.cont [3/8] 0, 128
        %1683 = vxpose.xlu0.c.b16.cont [4/8] 0, 128
        %1684 = vxpose.xlu0.c.b16.cont [5/8] 0, 128
        %1685 = vxpose.xlu0.c.b16.cont [6/8] 0, 128
        %1686 = vxpose.xlu0.c.b16.cont [7/8] 0, 128
        %1687 = vxpose.xlu0.c.b16.end [8/8] 0, 128
        %v1688 = vpop.trf.xlu0
        %v1689 = vpop.trf.xlu0
        %v1690 = vpop.trf.xlu0
        %v1691 = vpop.trf.xlu0
        %v1692 = vpop.trf.xlu0
        %v1693 = vpop.trf.xlu0
        %v1694 = vpop.trf.xlu0
        %v1695 = vpop.trf.xlu0
        %1696 = vxpose.xlu0.c.b16.start [1/8] %v1606, 128
        %1697 = vxpose.xlu0.c.b16.cont [2/8] 0, 128
        %1698 = vxpose.xlu0.c.b16.cont [3/8] 0, 128
        %1699 = vxpose.xlu0.c.b16.cont [4/8] 0, 128
        %1700 = vxpose.xlu0.c.b16.cont [5/8] 0, 128
        %1701 = vxpose.xlu0.c.b16.cont [6/8] 0, 128
        %1702 = vxpose.xlu0.c.b16.cont [7/8] 0, 128
        %1703 = vxpose.xlu0.c.b16.end [8/8] 0, 128
        %v1704 = vpop.trf.xlu0
        %v1705 = vpop.trf.xlu0
        %v1706 = vpop.trf.xlu0
        %v1707 = vpop.trf.xlu0
        %v1708 = vpop.trf.xlu0
        %v1709 = vpop.trf.xlu0
        %v1710 = vpop.trf.xlu0
        %v1711 = vpop.trf.xlu0
        %1712 = vxpose.xlu0.c.b16.start [1/8] %v1610, 128
        %1713 = vxpose.xlu0.c.b16.cont [2/8] 0, 128
        %1714 = vxpose.xlu0.c.b16.cont [3/8] 0, 128
        %1715 = vxpose.xlu0.c.b16.cont [4/8] 0, 128
        %1716 = vxpose.xlu0.c.b16.cont [5/8] 0, 128
        %1717 = vxpose.xlu0.c.b16.cont [6/8] 0, 128
        %1718 = vxpose.xlu0.c.b16.cont [7/8] 0, 128
        %1719 = vxpose.xlu0.c.b16.end [8/8] 0, 128
        %v1720 = vpop.trf.xlu0
        %v1721 = vpop.trf.xlu0
        %v1722 = vpop.trf.xlu0
        %v1723 = vpop.trf.xlu0
        %v1724 = vpop.trf.xlu0
        %v1725 = vpop.trf.xlu0
        %v1726 = vpop.trf.xlu0
        %v1727 = vpop.trf.xlu0
        %1728 = vxpose.xlu0.c.b16.start [1/8] %v1614, 128
        %1729 = vxpose.xlu0.c.b16.cont [2/8] 0, 128
        %1730 = vxpose.xlu0.c.b16.cont [3/8] 0, 128
        %1731 = vxpose.xlu0.c.b16.cont [4/8] 0, 128
        %1732 = vxpose.xlu0.c.b16.cont [5/8] 0, 128
        %1733 = vxpose.xlu0.c.b16.cont [6/8] 0, 128
        %1734 = vxpose.xlu0.c.b16.cont [7/8] 0, 128
        %1735 = vxpose.xlu0.c.b16.end [8/8] 0, 128
        %v1736 = vpop.trf.xlu0
        %v1737 = vpop.trf.xlu0
        %v1738 = vpop.trf.xlu0
        %v1739 = vpop.trf.xlu0
        %v1740 = vpop.trf.xlu0
        %v1741 = vpop.trf.xlu0
        %v1742 = vpop.trf.xlu0
        %v1743 = vpop.trf.xlu0
        %v1744 = vcombine.low %v1624, %v1688
        %v1746 = vunpack.c.l.s4 1983009808
        %v1747 = vunpack.c.0.s8 %v1746
        %v1748 = vlaneseq
        %v1749 = vshrl.u32 %v1748, 7
        %v1750 = vsub.s32 %v1747, %v1749
        %v1751 = vrot.slane %v1744, %v1750
        %v1752 = vcombine.low %v1656, %v1720
        %v1754 = vunpack.c.l.s4 1983009808
        %v1755 = vunpack.c.0.s8 %v1754
        %v1756 = vlaneseq
        %v1757 = vshrl.u32 %v1756, 7
        %v1758 = vsub.s32 %v1755, %v1757
        %v1759 = vrot.slane %v1752, %v1758
        %v1760 = vcombine.low %v1751, %v1759
        %v1762 = vunpack.c.l.s4 1934713408
        %v1763 = vunpack.c.0.s8 %v1762
        %v1764 = vlaneseq
        %v1765 = vshrl.u32 %v1764, 7
        %v1766 = vsub.s32 %v1763, %v1765
        %v1767 = vrot.slane %v1760, %v1766
        %v1768 = vcombine.high %v1767, 0
        %v1769 = vcombine.low %v1640, %v1704
        %v1771 = vunpack.c.l.s4 1983009808
        %v1772 = vunpack.c.0.s8 %v1771
        %v1773 = vlaneseq
        %v1774 = vshrl.u32 %v1773, 7
        %v1775 = vsub.s32 %v1772, %v1774
        %v1776 = vrot.slane %v1769, %v1775
        %v1777 = vcombine.low %v1672, %v1736
        %v1779 = vunpack.c.l.s4 1983009808
        %v1780 = vunpack.c.0.s8 %v1779
        %v1781 = vlaneseq
        %v1782 = vshrl.u32 %v1781, 7
        %v1783 = vsub.s32 %v1780, %v1782
        %v1784 = vrot.slane %v1777, %v1783
        %v1785 = vcombine.low %v1776, %v1784
        %v1787 = vunpack.c.l.s4 1934713408
        %v1788 = vunpack.c.0.s8 %v1787
        %v1789 = vlaneseq
        %v1790 = vshrl.u32 %v1789, 7
        %v1791 = vsub.s32 %v1788, %v1790
        %v1792 = vrot.slane %v1785, %v1791
        %v1793 = vcombine.high %v1792, 0
        %v1796 = vpack.i.b16 %v1792, %v1767
        %v1797 = vshrl.u32 %v1767, 16
        %v1798 = vshrl.u32 %v1792, 16
        %v1799 = vpack.i.b16 %v1798, %v1797
        %v1802 = vpack.i.b16 %v1793, %v1768
        %v1803 = vshrl.u32 %v1768, 16
        %v1804 = vshrl.u32 %v1793, 16
        %v1805 = vpack.i.b16 %v1804, %v1803
        %v1807 = vsel %vm1146, %v1796, 0
        %v1810 = vsel %vm1146, %v1376, 0
        %1812 = vmatprep.subr.bf16.mxu0 0
        %1813 = vmatpush1.bf16.xpose.msra.mxu0 %v1810
        %1814 = vmatprep.subr.bf16.mxu0 0
        %1815 = vmatpush1.bf16.xpose.msra.mxu0 0
        %1816 = vmatprep.subr.bf16.mxu0 0
        %1817 = vmatpush1.bf16.xpose.msra.mxu0 0
        %1818 = vmatprep.subr.bf16.mxu0 0
        %1819 = vmatpush1.bf16.xpose.msra.mxu0 0
        %1820 = vmatprep.subr.bf16.mxu0 0
        %1821 = vmatpush1.bf16.xpose.msra.mxu0 0
        %1822 = vmatprep.subr.bf16.mxu0 0
        %1823 = vmatpush1.bf16.xpose.msra.mxu0 0
        %1824 = vmatprep.subr.bf16.mxu0 0
        %1825 = vmatpush1.bf16.xpose.msra.mxu0 0
        %1826 = vmatprep.subr.bf16.mxu0 0
        %1827 = vmatpush1.bf16.xpose.msra.mxu0 0
        %1828 = vmatprep.subr.bf16.mxu0 0
        %1829 = vmatpush1.bf16.xpose.msra.mxu0 0
        %1830 = vmatprep.subr.bf16.mxu0 0
        %1831 = vmatpush1.bf16.xpose.msra.mxu0 0
        %1832 = vmatprep.subr.bf16.mxu0 0
        %1833 = vmatpush1.bf16.xpose.msra.mxu0 0
        %1834 = vmatprep.subr.bf16.mxu0 0
        %1835 = vmatpush1.bf16.xpose.msra.mxu0 0
        %1836 = vmatprep.subr.bf16.mxu0 0
        %1837 = vmatpush1.bf16.xpose.msra.mxu0 0
        %1838 = vmatprep.subr.bf16.mxu0 0
        %1839 = vmatpush1.bf16.xpose.msra.mxu0 0
        %1840 = vmatprep.subr.bf16.mxu0 0
        %1841 = vmatpush1.bf16.xpose.msra.mxu0 0
        %1842 = vmatprep.subr.bf16.mxu0 0
        %1843 = vmatpush1.bf16.xpose.msra.mxu0 0
        %1844 = vmatprep.mubr.bf16.mxu0 0
        %1845 = vmatmul.mubr.bf16.gmra.mrb[0].mxu0 %v1807
        %v1846 = vpop.f32.mrb[0].mxu0
        %v1847 = vadd.f32 0.0, %v1846
        %v1848 = vpop.f32.mrb[0].mxu0
        %v1849 = vpop.f32.mrb[0].mxu0
        %v1850 = vpop.f32.mrb[0].mxu0
        %1851 = vdwg.mxu0
        %v1853 = vsel %vm1146, %v1799, 0
        %v1856 = vsel %vm1146, %v1377, 0
        %1858 = vmatprep.subr.bf16.mxu0 0
        %1859 = vmatpush1.bf16.xpose.msra.mxu0 %v1856
        %1860 = vmatprep.subr.bf16.mxu0 0
        %1861 = vmatpush1.bf16.xpose.msra.mxu0 0
        %1862 = vmatprep.subr.bf16.mxu0 0
        %1863 = vmatpush1.bf16.xpose.msra.mxu0 0
        %1864 = vmatprep.subr.bf16.mxu0 0
        %1865 = vmatpush1.bf16.xpose.msra.mxu0 0
        %1866 = vmatprep.subr.bf16.mxu0 0
        %1867 = vmatpush1.bf16.xpose.msra.mxu0 0
        %1868 = vmatprep.subr.bf16.mxu0 0
        %1869 = vmatpush1.bf16.xpose.msra.mxu0 0
        %1870 = vmatprep.subr.bf16.mxu0 0
        %1871 = vmatpush1.bf16.xpose.msra.mxu0 0
        %1872 = vmatprep.subr.bf16.mxu0 0
        %1873 = vmatpush1.bf16.xpose.msra.mxu0 0
        %1874 = vmatprep.subr.bf16.mxu0 0
        %1875 = vmatpush1.bf16.xpose.msra.mxu0 0
        %1876 = vmatprep.subr.bf16.mxu0 0
        %1877 = vmatpush1.bf16.xpose.msra.mxu0 0
        %1878 = vmatprep.subr.bf16.mxu0 0
        %1879 = vmatpush1.bf16.xpose.msra.mxu0 0
        %1880 = vmatprep.subr.bf16.mxu0 0
        %1881 = vmatpush1.bf16.xpose.msra.mxu0 0
        %1882 = vmatprep.subr.bf16.mxu0 0
        %1883 = vmatpush1.bf16.xpose.msra.mxu0 0
        %1884 = vmatprep.subr.bf16.mxu0 0
        %1885 = vmatpush1.bf16.xpose.msra.mxu0 0
        %1886 = vmatprep.subr.bf16.mxu0 0
        %1887 = vmatpush1.bf16.xpose.msra.mxu0 0
        %1888 = vmatprep.subr.bf16.mxu0 0
        %1889 = vmatpush1.bf16.xpose.msra.mxu0 0
        %1890 = vmatprep.mubr.bf16.mxu0 0
        %1891 = vmatmul.mubr.bf16.gmra.mrb[0].mxu0 %v1853
        %v1892 = vpop.f32.mrb[0].mxu0
        %v1893 = vadd.f32 0.0, %v1892
        %v1894 = vpop.f32.mrb[0].mxu0
        %v1895 = vpop.f32.mrb[0].mxu0
        %v1896 = vpop.f32.mrb[0].mxu0
        %1897 = vdwg.mxu0
        %v1899 = vsel %vm1146, %v1802, 0
        %v1902 = vsel %vm1146, %v1378, 0
        %1904 = vmatprep.subr.bf16.mxu0 0
        %1905 = vmatpush1.bf16.xpose.msra.mxu0 %v1902
        %1906 = vmatprep.subr.bf16.mxu0 0
        %1907 = vmatpush1.bf16.xpose.msra.mxu0 0
        %1908 = vmatprep.subr.bf16.mxu0 0
        %1909 = vmatpush1.bf16.xpose.msra.mxu0 0
        %1910 = vmatprep.subr.bf16.mxu0 0
        %1911 = vmatpush1.bf16.xpose.msra.mxu0 0
        %1912 = vmatprep.subr.bf16.mxu0 0
        %1913 = vmatpush1.bf16.xpose.msra.mxu0 0
        %1914 = vmatprep.subr.bf16.mxu0 0
        %1915 = vmatpush1.bf16.xpose.msra.mxu0 0
        %1916 = vmatprep.subr.bf16.mxu0 0
        %1917 = vmatpush1.bf16.xpose.msra.mxu0 0
        %1918 = vmatprep.subr.bf16.mxu0 0
        %1919 = vmatpush1.bf16.xpose.msra.mxu0 0
        %1920 = vmatprep.subr.bf16.mxu0 0
        %1921 = vmatpush1.bf16.xpose.msra.mxu0 0
        %1922 = vmatprep.subr.bf16.mxu0 0
        %1923 = vmatpush1.bf16.xpose.msra.mxu0 0
        %1924 = vmatprep.subr.bf16.mxu0 0
        %1925 = vmatpush1.bf16.xpose.msra.mxu0 0
        %1926 = vmatprep.subr.bf16.mxu0 0
        %1927 = vmatpush1.bf16.xpose.msra.mxu0 0
        %1928 = vmatprep.subr.bf16.mxu0 0
        %1929 = vmatpush1.bf16.xpose.msra.mxu0 0
        %1930 = vmatprep.subr.bf16.mxu0 0
        %1931 = vmatpush1.bf16.xpose.msra.mxu0 0
        %1932 = vmatprep.subr.bf16.mxu0 0
        %1933 = vmatpush1.bf16.xpose.msra.mxu0 0
        %1934 = vmatprep.subr.bf16.mxu0 0
        %1935 = vmatpush1.bf16.xpose.msra.mxu0 0
        %1936 = vmatprep.mubr.bf16.mxu0 0
        %1937 = vmatmul.mubr.bf16.gmra.mrb[0].mxu0 %v1899
        %v1938 = vpop.f32.mrb[0].mxu0
        %v1939 = vadd.f32 0.0, %v1938
        %v1940 = vpop.f32.mrb[0].mxu0
        %v1941 = vpop.f32.mrb[0].mxu0
        %v1942 = vpop.f32.mrb[0].mxu0
        %1943 = vdwg.mxu0
        %v1945 = vsel %vm1146, %v1805, 0
        %v1948 = vsel %vm1146, %v1379, 0
        %1950 = vmatprep.subr.bf16.mxu0 0
        %1951 = vmatpush1.bf16.xpose.msra.mxu0 %v1948
        %1952 = vmatprep.subr.bf16.mxu0 0
        %1953 = vmatpush1.bf16.xpose.msra.mxu0 0
        %1954 = vmatprep.subr.bf16.mxu0 0
        %1955 = vmatpush1.bf16.xpose.msra.mxu0 0
        %1956 = vmatprep.subr.bf16.mxu0 0
        %1957 = vmatpush1.bf16.xpose.msra.mxu0 0
        %1958 = vmatprep.subr.bf16.mxu0 0
        %1959 = vmatpush1.bf16.xpose.msra.mxu0 0
        %1960 = vmatprep.subr.bf16.mxu0 0
        %1961 = vmatpush1.bf16.xpose.msra.mxu0 0
        %1962 = vmatprep.subr.bf16.mxu0 0
        %1963 = vmatpush1.bf16.xpose.msra.mxu0 0
        %1964 = vmatprep.subr.bf16.mxu0 0
        %1965 = vmatpush1.bf16.xpose.msra.mxu0 0
        %1966 = vmatprep.subr.bf16.mxu0 0
        %1967 = vmatpush1.bf16.xpose.msra.mxu0 0
        %1968 = vmatprep.subr.bf16.mxu0 0
        %1969 = vmatpush1.bf16.xpose.msra.mxu0 0
        %1970 = vmatprep.subr.bf16.mxu0 0
        %1971 = vmatpush1.bf16.xpose.msra.mxu0 0
        %1972 = vmatprep.subr.bf16.mxu0 0
        %1973 = vmatpush1.bf16.xpose.msra.mxu0 0
        %1974 = vmatprep.subr.bf16.mxu0 0
        %1975 = vmatpush1.bf16.xpose.msra.mxu0 0
        %1976 = vmatprep.subr.bf16.mxu0 0
        %1977 = vmatpush1.bf16.xpose.msra.mxu0 0
        %1978 = vmatprep.subr.bf16.mxu0 0
        %1979 = vmatpush1.bf16.xpose.msra.mxu0 0
        %1980 = vmatprep.subr.bf16.mxu0 0
        %1981 = vmatpush1.bf16.xpose.msra.mxu0 0
        %1982 = vmatprep.mubr.bf16.mxu0 0
        %1983 = vmatmul.mubr.bf16.gmra.mrb[0].mxu0 %v1945
        %v1984 = vpop.f32.mrb[0].mxu0
        %v1985 = vadd.f32 0.0, %v1984
        %v1986 = vpop.f32.mrb[0].mxu0
        %v1987 = vpop.f32.mrb[0].mxu0
        %v1988 = vpop.f32.mrb[0].mxu0
        %1989 = vdwg.mxu0
        %1990 = vxpose.xlu0.b32.start [1/16] %v1847, 128
        %1991 = vxpose.xlu0.b32.cont [2/16] 0.0, 128
        %1992 = vxpose.xlu0.b32.cont [3/16] 0.0, 128
        %1993 = vxpose.xlu0.b32.cont [4/16] 0.0, 128
        %1994 = vxpose.xlu0.b32.cont [5/16] 0.0, 128
        %1995 = vxpose.xlu0.b32.cont [6/16] 0.0, 128
        %1996 = vxpose.xlu0.b32.cont [7/16] 0.0, 128
        %1997 = vxpose.xlu0.b32.cont [8/16] 0.0, 128
        %1998 = vxpose.xlu0.b32.cont [9/16] 0.0, 128
        %1999 = vxpose.xlu0.b32.cont [10/16] 0.0, 128
        %2000 = vxpose.xlu0.b32.cont [11/16] 0.0, 128
        %2001 = vxpose.xlu0.b32.cont [12/16] 0.0, 128
        %2002 = vxpose.xlu0.b32.cont [13/16] 0.0, 128
        %2003 = vxpose.xlu0.b32.cont [14/16] 0.0, 128
        %2004 = vxpose.xlu0.b32.cont [15/16] 0.0, 128
        %2005 = vxpose.xlu0.b32.end [16/16] 0.0, 128
        %v2006 = vpop.trf.xlu0
        %v2007 = vpop.trf.xlu0
        %v2008 = vpop.trf.xlu0
        %v2009 = vpop.trf.xlu0
        %v2010 = vpop.trf.xlu0
        %v2011 = vpop.trf.xlu0
        %v2012 = vpop.trf.xlu0
        %v2013 = vpop.trf.xlu0
        %v2014 = vpop.trf.xlu0
        %v2015 = vpop.trf.xlu0
        %v2016 = vpop.trf.xlu0
        %v2017 = vpop.trf.xlu0
        %v2018 = vpop.trf.xlu0
        %v2019 = vpop.trf.xlu0
        %v2020 = vpop.trf.xlu0
        %v2021 = vpop.trf.xlu0
        %2022 = vxpose.xlu0.b32.start [1/16] %v1893, 128
        %2023 = vxpose.xlu0.b32.cont [2/16] 0.0, 128
        %2024 = vxpose.xlu0.b32.cont [3/16] 0.0, 128
        %2025 = vxpose.xlu0.b32.cont [4/16] 0.0, 128
        %2026 = vxpose.xlu0.b32.cont [5/16] 0.0, 128
        %2027 = vxpose.xlu0.b32.cont [6/16] 0.0, 128
        %2028 = vxpose.xlu0.b32.cont [7/16] 0.0, 128
        %2029 = vxpose.xlu0.b32.cont [8/16] 0.0, 128
        %2030 = vxpose.xlu0.b32.cont [9/16] 0.0, 128
        %2031 = vxpose.xlu0.b32.cont [10/16] 0.0, 128
        %2032 = vxpose.xlu0.b32.cont [11/16] 0.0, 128
        %2033 = vxpose.xlu0.b32.cont [12/16] 0.0, 128
        %2034 = vxpose.xlu0.b32.cont [13/16] 0.0, 128
        %2035 = vxpose.xlu0.b32.cont [14/16] 0.0, 128
        %2036 = vxpose.xlu0.b32.cont [15/16] 0.0, 128
        %2037 = vxpose.xlu0.b32.end [16/16] 0.0, 128
        %v2038 = vpop.trf.xlu0
        %v2039 = vpop.trf.xlu0
        %v2040 = vpop.trf.xlu0
        %v2041 = vpop.trf.xlu0
        %v2042 = vpop.trf.xlu0
        %v2043 = vpop.trf.xlu0
        %v2044 = vpop.trf.xlu0
        %v2045 = vpop.trf.xlu0
        %v2046 = vpop.trf.xlu0
        %v2047 = vpop.trf.xlu0
        %v2048 = vpop.trf.xlu0
        %v2049 = vpop.trf.xlu0
        %v2050 = vpop.trf.xlu0
        %v2051 = vpop.trf.xlu0
        %v2052 = vpop.trf.xlu0
        %v2053 = vpop.trf.xlu0
        %2054 = vxpose.xlu0.b32.start [1/16] %v1939, 128
        %2055 = vxpose.xlu0.b32.cont [2/16] 0.0, 128
        %2056 = vxpose.xlu0.b32.cont [3/16] 0.0, 128
        %2057 = vxpose.xlu0.b32.cont [4/16] 0.0, 128
        %2058 = vxpose.xlu0.b32.cont [5/16] 0.0, 128
        %2059 = vxpose.xlu0.b32.cont [6/16] 0.0, 128
        %2060 = vxpose.xlu0.b32.cont [7/16] 0.0, 128
        %2061 = vxpose.xlu0.b32.cont [8/16] 0.0, 128
        %2062 = vxpose.xlu0.b32.cont [9/16] 0.0, 128
        %2063 = vxpose.xlu0.b32.cont [10/16] 0.0, 128
        %2064 = vxpose.xlu0.b32.cont [11/16] 0.0, 128
        %2065 = vxpose.xlu0.b32.cont [12/16] 0.0, 128
        %2066 = vxpose.xlu0.b32.cont [13/16] 0.0, 128
        %2067 = vxpose.xlu0.b32.cont [14/16] 0.0, 128
        %2068 = vxpose.xlu0.b32.cont [15/16] 0.0, 128
        %2069 = vxpose.xlu0.b32.end [16/16] 0.0, 128
        %v2070 = vpop.trf.xlu0
        %v2071 = vpop.trf.xlu0
        %v2072 = vpop.trf.xlu0
        %v2073 = vpop.trf.xlu0
        %v2074 = vpop.trf.xlu0
        %v2075 = vpop.trf.xlu0
        %v2076 = vpop.trf.xlu0
        %v2077 = vpop.trf.xlu0
        %v2078 = vpop.trf.xlu0
        %v2079 = vpop.trf.xlu0
        %v2080 = vpop.trf.xlu0
        %v2081 = vpop.trf.xlu0
        %v2082 = vpop.trf.xlu0
        %v2083 = vpop.trf.xlu0
        %v2084 = vpop.trf.xlu0
        %v2085 = vpop.trf.xlu0
        %2086 = vxpose.xlu0.b32.start [1/16] %v1985, 128
        %2087 = vxpose.xlu0.b32.cont [2/16] 0.0, 128
        %2088 = vxpose.xlu0.b32.cont [3/16] 0.0, 128
        %2089 = vxpose.xlu0.b32.cont [4/16] 0.0, 128
        %2090 = vxpose.xlu0.b32.cont [5/16] 0.0, 128
        %2091 = vxpose.xlu0.b32.cont [6/16] 0.0, 128
        %2092 = vxpose.xlu0.b32.cont [7/16] 0.0, 128
        %2093 = vxpose.xlu0.b32.cont [8/16] 0.0, 128
        %2094 = vxpose.xlu0.b32.cont [9/16] 0.0, 128
        %2095 = vxpose.xlu0.b32.cont [10/16] 0.0, 128
        %2096 = vxpose.xlu0.b32.cont [11/16] 0.0, 128
        %2097 = vxpose.xlu0.b32.cont [12/16] 0.0, 128
        %2098 = vxpose.xlu0.b32.cont [13/16] 0.0, 128
        %2099 = vxpose.xlu0.b32.cont [14/16] 0.0, 128
        %2100 = vxpose.xlu0.b32.cont [15/16] 0.0, 128
        %2101 = vxpose.xlu0.b32.end [16/16] 0.0, 128
        %v2102 = vpop.trf.xlu0
        %v2103 = vpop.trf.xlu0
        %v2104 = vpop.trf.xlu0
        %v2105 = vpop.trf.xlu0
        %v2106 = vpop.trf.xlu0
        %v2107 = vpop.trf.xlu0
        %v2108 = vpop.trf.xlu0
        %v2109 = vpop.trf.xlu0
        %v2110 = vpop.trf.xlu0
        %v2111 = vpop.trf.xlu0
        %v2112 = vpop.trf.xlu0
        %v2113 = vpop.trf.xlu0
        %v2114 = vpop.trf.xlu0
        %v2115 = vpop.trf.xlu0
        %v2116 = vpop.trf.xlu0
        %v2117 = vpop.trf.xlu0
        %v2118 = vcombine.low %v2006, %v2070
        %v2119 = vcombine.high %v2006, %v2070
        %v2121 = vunpack.c.l.s4 1983009808
        %v2122 = vunpack.c.0.s8 %v2121
        %v2123 = vlaneseq
        %v2124 = vshrl.u32 %v2123, 7
        %v2125 = vsub.s32 %v2122, %v2124
        %v2126 = vrot.slane %v2118, %v2125
        %v2128 = vunpack.c.l.s4 1983009808
        %v2129 = vunpack.c.0.s8 %v2128
        %v2130 = vlaneseq
        %v2131 = vshrl.u32 %v2130, 7
        %v2132 = vsub.s32 %v2129, %v2131
        %v2133 = vrot.slane %v2119, %v2132
        %v2134 = vcombine.low %v2038, %v2102
        %v2135 = vcombine.high %v2038, %v2102
        %v2137 = vunpack.c.l.s4 1983009808
        %v2138 = vunpack.c.0.s8 %v2137
        %v2139 = vlaneseq
        %v2140 = vshrl.u32 %v2139, 7
        %v2141 = vsub.s32 %v2138, %v2140
        %v2142 = vrot.slane %v2134, %v2141
        %v2144 = vunpack.c.l.s4 1983009808
        %v2145 = vunpack.c.0.s8 %v2144
        %v2146 = vlaneseq
        %v2147 = vshrl.u32 %v2146, 7
        %v2148 = vsub.s32 %v2145, %v2147
        %v2149 = vrot.slane %v2135, %v2148
        %v2150 = vcombine.low %v2126, %v2142
        %v2151 = vcombine.high %v2126, %v2142
        %v2153 = vunpack.c.l.s4 1934713408
        %v2154 = vunpack.c.0.s8 %v2153
        %v2155 = vlaneseq
        %v2156 = vshrl.u32 %v2155, 7
        %v2157 = vsub.s32 %v2154, %v2156
        %v2158 = vrot.slane %v2150, %v2157
        %v2160 = vunpack.c.l.s4 1934713408
        %v2161 = vunpack.c.0.s8 %v2160
        %v2162 = vlaneseq
        %v2163 = vshrl.u32 %v2162, 7
        %v2164 = vsub.s32 %v2161, %v2163
        %v2165 = vrot.slane %v2151, %v2164
        %v2166 = vcombine.low %v2133, %v2149
        %v2167 = vcombine.high %v2133, %v2149
        %v2169 = vunpack.c.l.s4 1934713408
        %v2170 = vunpack.c.0.s8 %v2169
        %v2171 = vlaneseq
        %v2172 = vshrl.u32 %v2171, 7
        %v2173 = vsub.s32 %v2170, %v2172
        %v2174 = vrot.slane %v2166, %v2173
        %v2176 = vunpack.c.l.s4 1934713408
        %v2177 = vunpack.c.0.s8 %v2176
        %v2178 = vlaneseq
        %v2179 = vshrl.u32 %v2178, 7
        %v2180 = vsub.s32 %v2177, %v2179
        %v2181 = vrot.slane %v2167, %v2180
        %v2182 = vcombine.high %v2158, 0.0
        %v2183 = vcombine.high %v2165, 0.0
        %v2184 = vcombine.high %v2174, 0.0
        %v2185 = vcombine.high %v2181, 0.0
        %v2186 = vcombine.low %v2158, %v2165
        %v2188 = vunpack.c.l.s4 1983009808
        %v2189 = vunpack.c.0.s8 %v2188
        %v2190 = vlaneseq
        %v2191 = vshrl.u32 %v2190, 7
        %v2192 = vsub.s32 %v2189, %v2191
        %v2193 = vrot.slane %v2186, %v2192
        %v2194 = vcombine.low %v2182, %v2183
        %v2196 = vunpack.c.l.s4 1983009808
        %v2197 = vunpack.c.0.s8 %v2196
        %v2198 = vlaneseq
        %v2199 = vshrl.u32 %v2198, 7
        %v2200 = vsub.s32 %v2197, %v2199
        %v2201 = vrot.slane %v2194, %v2200
        %v2202 = vcombine.low %v2174, %v2181
        %v2204 = vunpack.c.l.s4 1983009808
        %v2205 = vunpack.c.0.s8 %v2204
        %v2206 = vlaneseq
        %v2207 = vshrl.u32 %v2206, 7
        %v2208 = vsub.s32 %v2205, %v2207
        %v2209 = vrot.slane %v2202, %v2208
        %v2210 = vcombine.low %v2184, %v2185
        %v2212 = vunpack.c.l.s4 1983009808
        %v2213 = vunpack.c.0.s8 %v2212
        %v2214 = vlaneseq
        %v2215 = vshrl.u32 %v2214, 7
        %v2216 = vsub.s32 %v2213, %v2215
        %v2217 = vrot.slane %v2210, %v2216
        %v2218 = vcombine.low %v2193, %v2201
        %v2219 = vcombine.high %v2193, %v2201
        %v2221 = vunpack.c.l.s4 1934713408
        %v2222 = vunpack.c.0.s8 %v2221
        %v2223 = vlaneseq
        %v2224 = vshrl.u32 %v2223, 7
        %v2225 = vsub.s32 %v2222, %v2224
        %v2226 = vrot.slane %v2218, %v2225
        %v2228 = vunpack.c.l.s4 1934713408
        %v2229 = vunpack.c.0.s8 %v2228
        %v2230 = vlaneseq
        %v2231 = vshrl.u32 %v2230, 7
        %v2232 = vsub.s32 %v2229, %v2231
        %v2233 = vrot.slane %v2219, %v2232
        %v2234 = vcombine.low %v2209, %v2217
        %v2235 = vcombine.high %v2209, %v2217
        %v2237 = vunpack.c.l.s4 1934713408
        %v2238 = vunpack.c.0.s8 %v2237
        %v2239 = vlaneseq
        %v2240 = vshrl.u32 %v2239, 7
        %v2241 = vsub.s32 %v2238, %v2240
        %v2242 = vrot.slane %v2234, %v2241
        %v2244 = vunpack.c.l.s4 1934713408
        %v2245 = vunpack.c.0.s8 %v2244
        %v2246 = vlaneseq
        %v2247 = vshrl.u32 %v2246, 7
        %v2248 = vsub.s32 %v2245, %v2247
        %v2249 = vrot.slane %v2235, %v2248
        %v2250 = vcombine.low %v2226, %v2242
        %v2251 = vcombine.high %v2226, %v2242
        %v2252 = vcombine.low %v2233, %v2249
        %v2253 = vcombine.high %v2233, %v2249
        %2255 = vrot.lane.b32.xlu0 %v2251, 8
        %v2256 = vpop.permute.xlu0 %2255
        %2259 = vrot.lane.b32.xlu0 %v2252, 16
        %v2260 = vpop.permute.xlu0 %2259
        %2263 = vrot.lane.b32.xlu0 %v2253, 24
        %v2264 = vpop.permute.xlu0 %2263
        %v2266 = vsel %vm1146, %v2250, %v2256
        %vm2267 = vcmask 130048
        %v2268 = vsel %vm2267, %v2266, %v2260
        %vm2269 = vcmask 195584
        %v2270 = vsel %vm2269, %v2268, %v2264
        %v2271 = vpack.c.bf16 %v2270, %v2270
        %v2272 = vld [vmem:[%s3] sm:$0xf]
        %v2273 = vld [vmem:[%s3 + $0x4] sm:$0xf]
        %v2274 = vld [vmem:[%s3 + $0x8] sm:$0xf]
        %v2275 = vld [vmem:[%s3 + $0xc] sm:$0xf]
        %v2276 = vld [vmem:[%s4] sm:$0x1]
        %v2278 = vlaneseq
        %v2279 = vshrl.u32 %v2278, 7
        %v2280 = vsub.s32 0, %v2279
        %v2281 = vrot.slane %v2276, %v2280
        %v2287 = vunpack.c.l.b16 %v2272
        %v2288 = vunpack.c.l.b16 %v2273
        %v2289 = vunpack.c.l.b16 %v2274
        %v2290 = vunpack.c.l.b16 %v2275
        %v2291 = vpack.c.b16 %v2288, %v2287
        %v2292 = vpack.c.b16 %v2290, %v2289
        %v2296 = vsel %vm330, %v2271, 0
        %2298 = vmatprep.subr.bf16.mxu0 0
        %2299 = vmatpush1.bf16.msra.mxu0 %v2291
        %2300 = vmatprep.subr.bf16.mxu0 0
        %2301 = vmatpush1.bf16.msra.mxu0 %v2292
        %2302 = vmatprep.subr.bf16.mxu0 0
        %2303 = vmatpush1.bf16.msra.mxu0 0
        %2304 = vmatprep.subr.bf16.mxu0 0
        %2305 = vmatpush1.bf16.msra.mxu0 0
        %2306 = vmatprep.subr.bf16.mxu0 0
        %2307 = vmatpush1.bf16.msra.mxu0 0
        %2308 = vmatprep.subr.bf16.mxu0 0
        %2309 = vmatpush1.bf16.msra.mxu0 0
        %2310 = vmatprep.subr.bf16.mxu0 0
        %2311 = vmatpush1.bf16.msra.mxu0 0
        %2312 = vmatprep.subr.bf16.mxu0 0
        %2313 = vmatpush1.bf16.msra.mxu0 0
        %2314 = vmatprep.subr.bf16.mxu0 0
        %2315 = vmatpush1.bf16.msra.mxu0 0
        %2316 = vmatprep.subr.bf16.mxu0 0
        %2317 = vmatpush1.bf16.msra.mxu0 0
        %2318 = vmatprep.subr.bf16.mxu0 0
        %2319 = vmatpush1.bf16.msra.mxu0 0
        %2320 = vmatprep.subr.bf16.mxu0 0
        %2321 = vmatpush1.bf16.msra.mxu0 0
        %2322 = vmatprep.subr.bf16.mxu0 0
        %2323 = vmatpush1.bf16.msra.mxu0 0
        %2324 = vmatprep.subr.bf16.mxu0 0
        %2325 = vmatpush1.bf16.msra.mxu0 0
        %2326 = vmatprep.subr.bf16.mxu0 0
        %2327 = vmatpush1.bf16.msra.mxu0 0
        %2328 = vmatprep.subr.bf16.mxu0 0
        %2329 = vmatpush1.bf16.msra.mxu0 0
        %2330 = vmatprep.mubr.bf16.mxu0 0
        %2331 = vmatmul.mubr.bf16.gmra.mrb[0].mxu0 %v2296
        %v2332 = vpop.f32.mrb[0].mxu0
        %v2333 = vadd.f32 %v2281, %v2332
        %v2334 = vpop.f32.mrb[0].mxu0
        %v2335 = vpop.f32.mrb[0].mxu0
        %v2336 = vpop.f32.mrb[0].mxu0
        %2337 = vdwg.mxu0
        %v2338 = vadd.f32 %v329, %v2333
        %v2339 = vsel %vm330, %v2338, 0.0
        %2340 = vadd.xlane.f32.xlu0 %v2339
        %v2341 = vpop.xlane.xlu0 %2340
        %v2342 = vmul.f32 %v2341, %v334
        %v2343 = vsub.f32 %v2338, %v2342
        %v2344 = vmul.f32 %v2343, %v2343
        %v2345 = vsel %vm330, %v2344, 0.0
        %2346 = vadd.xlane.f32.xlu0 %v2345
        %v2347 = vpop.xlane.xlu0 %2346
        %v2348 = vmul.f32 %v2347, %v334
        %v2349 = vadd.f32 %v2348, 1e-06
        %v2350 = vrsqrt.pop %v2349
        %v2351 = vmul.f32 %v2343, %v2350
        %v2352 = vpack.c.bf16 %v2351, %v2351
        %v2353 = vld [vmem:[%s5] sm:$0xf]
        %v2354 = vld [vmem:[%s5 + $0x4] sm:$0xf]
        %v2355 = vld [vmem:[%s5 + $0x8] sm:$0xf]
        %v2356 = vld [vmem:[%s5 + $0xc] sm:$0xf]
        %v2357 = vld [vmem:[%s6] sm:$0x1]
        %v2359 = vlaneseq
        %v2360 = vshrl.u32 %v2359, 7
        %v2361 = vsub.s32 0, %v2360
        %v2362 = vrot.slane %v2357, %v2361
        %v2368 = vunpack.c.l.b16 %v2353
        %v2369 = vunpack.c.l.b16 %v2354
        %v2370 = vunpack.c.l.b16 %v2355
        %v2371 = vunpack.c.l.b16 %v2356
        %v2372 = vpack.c.b16 %v2369, %v2368
        %v2373 = vpack.c.b16 %v2371, %v2370
        %v2377 = vsel %vm330, %v2352, 0
        %2379 = vmatprep.subr.bf16.mxu0 0
        %2380 = vmatpush1.bf16.msra.mxu0 %v2372
        %2381 = vmatprep.subr.bf16.mxu0 0
        %2382 = vmatpush1.bf16.msra.mxu0 %v2373
        %2383 = vmatprep.subr.bf16.mxu0 0
        %2384 = vmatpush1.bf16.msra.mxu0 0
        %2385 = vmatprep.subr.bf16.mxu0 0
        %2386 = vmatpush1.bf16.msra.mxu0 0
        %2387 = vmatprep.subr.bf16.mxu0 0
        %2388 = vmatpush1.bf16.msra.mxu0 0
        %2389 = vmatprep.subr.bf16.mxu0 0
        %2390 = vmatpush1.bf16.msra.mxu0 0
        %2391 = vmatprep.subr.bf16.mxu0 0
        %2392 = vmatpush1.bf16.msra.mxu0 0
        %2393 = vmatprep.subr.bf16.mxu0 0
        %2394 = vmatpush1.bf16.msra.mxu0 0
        %2395 = vmatprep.subr.bf16.mxu0 0
        %2396 = vmatpush1.bf16.msra.mxu0 0
        %2397 = vmatprep.subr.bf16.mxu0 0
        %2398 = vmatpush1.bf16.msra.mxu0 0
        %2399 = vmatprep.subr.bf16.mxu0 0
        %2400 = vmatpush1.bf16.msra.mxu0 0
        %2401 = vmatprep.subr.bf16.mxu0 0
        %2402 = vmatpush1.bf16.msra.mxu0 0
        %2403 = vmatprep.subr.bf16.mxu0 0
        %2404 = vmatpush1.bf16.msra.mxu0 0
        %2405 = vmatprep.subr.bf16.mxu0 0
        %2406 = vmatpush1.bf16.msra.mxu0 0
        %2407 = vmatprep.subr.bf16.mxu0 0
        %2408 = vmatpush1.bf16.msra.mxu0 0
        %2409 = vmatprep.subr.bf16.mxu0 0
        %2410 = vmatpush1.bf16.msra.mxu0 0
        %2411 = vmatprep.mubr.bf16.mxu0 0
        %2412 = vmatmul.mubr.bf16.gmra.mrb[0].mxu0 %v2377
        %v2413 = vpop.f32.mrb[0].mxu0
        %v2414 = vadd.f32 %v2362, %v2413
        %v2415 = vpop.f32.mrb[0].mxu0
        %v2416 = vpop.f32.mrb[0].mxu0
        %v2417 = vpop.f32.mrb[0].mxu0
        %2418 = vdwg.mxu0
        %v2419 = vmul.f32 %v2414, 0.5
        %v2420 = vmul.f32 %v2414, 0.70710677
        %vm2421 = vcmp.ge.f32.partialorder %v2420, 0.0
        %v2422 = vsel %vm2421, 1.0, -1.0
        %v2423 = vand.u32 2147483647, %v2420
        %v2424 = vmul.f32 %v2423, 0.3275911
        %v2425 = vadd.f32 %v2424, 1.0
        %v2426 = vrcp.pop %v2425
        %v2427 = vmul.f32 %v2426, 1.0614054
        %v2428 = vadd.f32 %v2427, -1.4531521
        %v2429 = vmul.f32 %v2428, %v2426
        %v2430 = vadd.f32 %v2429, 1.4214138
        %v2431 = vmul.f32 %v2430, %v2426
        %v2432 = vadd.f32 %v2431, -0.28449672
        %v2433 = vmul.f32 %v2432, %v2426
        %v2434 = vadd.f32 %v2433, 0.2548296
        %v2435 = vmul.f32 %v2434, %v2426
        %v2436 = vsub.f32 0.0, %v2423
        %v2437 = vmul.f32 %v2436, %v2423
        %v2438 = vmul.f32 %v2437, 1.442695
        %v2439 = vpow.pop %v2438
        %v2440 = vmul.f32 %v2435, %v2439
        %v2441 = vsub.f32 1.0, %v2440
        %v2442 = vmul.f32 %v2422, %v2441
        %v2443 = vadd.f32 %v2442, 1.0
        %v2444 = vmul.f32 %v2419, %v2443
        %v2445 = vpack.c.bf16 %v2444, %v2444
        %v2446 = vld [vmem:[%s7] sm:$0xf]
        %v2447 = vld [vmem:[%s7 + $0x4] sm:$0xf]
        %v2448 = vld [vmem:[%s7 + $0x8] sm:$0xf]
        %v2449 = vld [vmem:[%s7 + $0xc] sm:$0xf]
        %v2450 = vld [vmem:[%s7 + $0x10] sm:$0xf]
        %v2451 = vld [vmem:[%s7 + $0x14] sm:$0xf]
        %v2452 = vld [vmem:[%s7 + $0x18] sm:$0xf]
        %v2453 = vld [vmem:[%s7 + $0x1c] sm:$0xf]
        %v2454 = vld [vmem:[%s7 + $0x20] sm:$0xf]
        %v2455 = vld [vmem:[%s7 + $0x24] sm:$0xf]
        %v2456 = vld [vmem:[%s7 + $0x28] sm:$0xf]
        %v2457 = vld [vmem:[%s7 + $0x2c] sm:$0xf]
        %v2458 = vld [vmem:[%s7 + $0x30] sm:$0xf]
        %v2459 = vld [vmem:[%s7 + $0x34] sm:$0xf]
        %v2460 = vld [vmem:[%s7 + $0x38] sm:$0xf]
        %v2461 = vld [vmem:[%s7 + $0x3c] sm:$0xf]
        %v2462 = vld [vmem:[%s8] sm:$0x1]
        %v2464 = vlaneseq
        %v2465 = vshrl.u32 %v2464, 7
        %v2466 = vsub.s32 0, %v2465
        %v2467 = vrot.slane %v2462, %v2466
        %v2485 = vunpack.c.l.b16 %v2446
        %v2486 = vunpack.c.l.b16 %v2447
        %v2487 = vunpack.c.l.b16 %v2448
        %v2488 = vunpack.c.l.b16 %v2449
        %v2489 = vunpack.c.l.b16 %v2450
        %v2490 = vunpack.c.l.b16 %v2451
        %v2491 = vunpack.c.l.b16 %v2452
        %v2492 = vunpack.c.l.b16 %v2453
        %v2493 = vunpack.c.l.b16 %v2454
        %v2494 = vunpack.c.l.b16 %v2455
        %v2495 = vunpack.c.l.b16 %v2456
        %v2496 = vunpack.c.l.b16 %v2457
        %v2497 = vunpack.c.l.b16 %v2458
        %v2498 = vunpack.c.l.b16 %v2459
        %v2499 = vunpack.c.l.b16 %v2460
        %v2500 = vunpack.c.l.b16 %v2461
        %v2501 = vpack.c.b16 %v2486, %v2485
        %v2502 = vpack.c.b16 %v2488, %v2487
        %v2503 = vpack.c.b16 %v2490, %v2489
        %v2504 = vpack.c.b16 %v2492, %v2491
        %v2505 = vpack.c.b16 %v2494, %v2493
        %v2506 = vpack.c.b16 %v2496, %v2495
        %v2507 = vpack.c.b16 %v2498, %v2497
        %v2508 = vpack.c.b16 %v2500, %v2499
        %2517 = vmatprep.subr.bf16.mxu0 0
        %2518 = vmatpush1.bf16.msra.mxu0 %v2501
        %2519 = vmatprep.subr.bf16.mxu0 0
        %2520 = vmatpush1.bf16.msra.mxu0 %v2502
        %2521 = vmatprep.subr.bf16.mxu0 0
        %2522 = vmatpush1.bf16.msra.mxu0 %v2503
        %2523 = vmatprep.subr.bf16.mxu0 0
        %2524 = vmatpush1.bf16.msra.mxu0 %v2504
        %2525 = vmatprep.subr.bf16.mxu0 0
        %2526 = vmatpush1.bf16.msra.mxu0 %v2505
        %2527 = vmatprep.subr.bf16.mxu0 0
        %2528 = vmatpush1.bf16.msra.mxu0 %v2506
        %2529 = vmatprep.subr.bf16.mxu0 0
        %2530 = vmatpush1.bf16.msra.mxu0 %v2507
        %2531 = vmatprep.subr.bf16.mxu0 0
        %2532 = vmatpush1.bf16.msra.mxu0 %v2508
        %2533 = vmatprep.subr.bf16.mxu0 0
        %2534 = vmatpush1.bf16.msra.mxu0 0
        %2535 = vmatprep.subr.bf16.mxu0 0
        %2536 = vmatpush1.bf16.msra.mxu0 0
        %2537 = vmatprep.subr.bf16.mxu0 0
        %2538 = vmatpush1.bf16.msra.mxu0 0
        %2539 = vmatprep.subr.bf16.mxu0 0
        %2540 = vmatpush1.bf16.msra.mxu0 0
        %2541 = vmatprep.subr.bf16.mxu0 0
        %2542 = vmatpush1.bf16.msra.mxu0 0
        %2543 = vmatprep.subr.bf16.mxu0 0
        %2544 = vmatpush1.bf16.msra.mxu0 0
        %2545 = vmatprep.subr.bf16.mxu0 0
        %2546 = vmatpush1.bf16.msra.mxu0 0
        %2547 = vmatprep.subr.bf16.mxu0 0
        %2548 = vmatpush1.bf16.msra.mxu0 0
        %2549 = vmatprep.mubr.bf16.mxu0 0
        %2550 = vmatmul.mubr.bf16.gmra.mrb[0].mxu0 %v2445
        %v2551 = vpop.f32.mrb[0].mxu0
        %v2552 = vadd.f32 %v2467, %v2551
        %v2553 = vpop.f32.mrb[0].mxu0
        %v2554 = vpop.f32.mrb[0].mxu0
        %v2555 = vpop.f32.mrb[0].mxu0
        %2556 = vdwg.mxu0
        %v2557 = vadd.f32 %v2338, %v2552
        %2558 = vst.msk [vmem:[%s323] sm:$0xff] %vm330, %v2557
        %s2559 = sand.u32 %s225, 1
        %s2560 = scalar_lea.sflag [#allocation3], %s2559
        %s2561 = sand.u32 %s225, 1
        %s2562 = smul.addr %s2561, 8
        %s2563 = scalar_lea.vmem [#allocation2], %s2562
        // Predicated region
        $region57: #{tpu_custom_call.1} parent=55 // pred_check
          %p2564 = pneg %p235
        $region58: #{tpu_custom_call.1} parent=55 // pred_check_branch
          %2566 = sbr.rel (%p2564) target = $region60
        $region59: #{tpu_custom_call.1} parent=55 // pred_region
          %s2568 = ssub.s32 128, 128
          %2569 = vsyncadd %s2560, %s2568
          %s2570 = smul.addr %s23, 128
          %s2571 = scalar_lea.hbm %s9, %s2570
          %s2573 = sshll.u32 %s2563, 4
          %s2574 = int_to_ptr.vmem [resolvable:$true] %s2573
          %2576 = dma.vmem_to_hbm [thread:$0]  %s2574, 128, %s2571, %s2560
        $region60: #{tpu_custom_call.1} parent=55 // pred_fallthru
          _
      $region56: #{tpu_custom_call.1} parent=5 // pred_fallthru
        _
      %p2577 = scmp.le.s32.totalorder 2, %s18
      // Predicated region
      $region61: #{tpu_custom_call.1} parent=5 // pred_check
        %p2578 = pneg %p2577
      $region62: #{tpu_custom_call.1} parent=5 // pred_check_branch
        %2580 = sbr.rel (%p2578) target = $region64
      $region63: #{tpu_custom_call.1} parent=5 // pred_region
        %s2581 = ssub.s32 %s18, 2
        // Predicated region
        $region65: #{tpu_custom_call.1} parent=63 // pred_check
          %p2582 = pneg %p241
        $region66: #{tpu_custom_call.1} parent=63 // pred_check_branch
          %2584 = sbr.rel (%p2582) target = $region68
        $region67: #{tpu_custom_call.1} parent=63 // pred_region
          %s2585 = sand.u32 %s226, 1
          %s2586 = scalar_lea.sflag [#allocation3], %s2585
          %s2587 = sand.u32 %s226, 1
          %s2588 = smul.addr %s2587, 8
          %s2589 = scalar_lea.vmem [#allocation2], %s2588
          %2590 = dma.done %s2586, 128
        $region68: #{tpu_custom_call.1} parent=63 // pred_fallthru
          _
      $region64: #{tpu_custom_call.1} parent=5 // pred_fallthru
        _
    $region6: #{tpu_custom_call.1} parent=1 // loop_footer
      %s22 = sadd.s32 1, %s18
    $region7: #{tpu_custom_call.1} parent=1 // loop_footer_branch
      %17 = sbr.rel target = $region3
    $region8: #{tpu_custom_call.1} parent=1 // loop_exit
      _
    %2591 = vsyncpa [#allocation3], 1
    %s2592 = scalar_lea.sflag [#allocation3], 1
    %2593 = vsyncpa %s2592, 1

</llo_original>
